<compile_context>
chip_gen: v7x
topology: tpu7x:2x2x1
jax: 0.10.0
libtpu: 0.0.40
codegen_flags: <defaults>
</compile_context>

<pallas_src>
import functools
import math

import jax
import jax.numpy as jnp
from jax.experimental import pallas as pl
from jax.experimental.pallas import tpu as pltpu

EPS = 1e-5                 # torch.nn.LayerNorm default eps
NEG_INF = -1e30            # additive attention-mask value for padded keys
INV_SQRT2 = 0.7071067811865476


# ----------------------------- in-kernel helpers -----------------------------

def _layernorm(x, gamma, beta):
    mu = jnp.mean(x, axis=-1, keepdims=True)
    var = jnp.mean((x - mu) ** 2, axis=-1, keepdims=True)
    return (x - mu) * jax.lax.rsqrt(var + EPS) * gamma + beta


def _erf(x):
    # Abramowitz & Stegun 7.1.26 rational approximation (|err| < 1.5e-7):
    # numerically ~identical to torch.nn.GELU()'s exact erf while only using
    # exp / mul / add / div, which are guaranteed to lower in Mosaic.
    p = 0.3275911
    a1, a2, a3, a4, a5 = (0.254829592, -0.284496736, 1.421413741,
                          -1.453152027, 1.061405429)
    s = jnp.where(x < 0.0, -1.0, 1.0)
    ax = jnp.abs(x)
    t = 1.0 / (1.0 + p * ax)
    poly = ((((a5 * t + a4) * t + a3) * t + a2) * t + a1) * t
    return s * (1.0 - poly * jnp.exp(-(ax * ax)))


def _gelu(x):
    # matches torch.nn.GELU() default (erf-based, non-approximate)
    return 0.5 * x * (1.0 + _erf(x * INV_SQRT2))


# ------------------------------ fused ViT kernel ------------------------------

def _vit_kernel(bb, NP, S, S_pad, D, F, H, cdt,
                patches_ref, pw_ref, pb_ref, cls_ref, pos_ref,
                small_ref, wqkv_ref, wout_ref, w1_ref, w2_ref,
                ng_ref, nb_ref, hw_ref, hb_ref,
                out_ref, tok_ref):
    l = pl.program_id(1)
    hd = D // H
    M = bb * S_pad

    # ---- patch embedding + cls token + positional embedding (first step) ----
    @pl.when(l == 0)
    def _embed():
        pf = patches_ref[...].reshape(bb * NP, -1)
        proj = jnp.dot(pf.astype(cdt), pw_ref[...],
                       preferred_element_type=jnp.float32) + pb_ref[...]
        proj = proj.reshape(bb, NP, D)
        cls_row = (cls_ref[...] + pos_ref[0:1, :]).reshape(1, 1, D)
        tok_ref[:, 0:1, :] = jnp.broadcast_to(cls_row, (bb, 1, D))
        tok_ref[:, 1:S, :] = proj + pos_ref[1:S, :]
        # Padded rows never act as keys (masked) but still flow through
        # LayerNorm / matmuls, so they must be finite: zero them once.
        tok_ref[:, S:, :] = jnp.zeros((bb, S_pad - S, D), jnp.float32)

    # ----------------------------- encoder layer l ----------------------------
    small = small_ref[0]                            # (8, Pmax) packed vectors
    g1 = small[0:1, :D]
    b1 = small[1:2, :D]
    g2 = small[2:3, :D]
    b2 = small[3:4, :D]
    bout = small[4:5, :D]
    bfc2 = small[5:6, :D]
    bqkv = small[6:7, :3 * D]
    bfc1 = small[7:8, :F]

    x = tok_ref[...].reshape(M, D)

    # --- multi-head self-attention (pre-norm); per-sample, per-head slices ---
    # 1/sqrt(head_dim) is already folded into the q columns of wqkv/bqkv.
    xn = _layernorm(x, g1, b1)
    qkv = jnp.dot(xn.astype(cdt), wqkv_ref[0],
                  preferred_element_type=jnp.float32) + bqkv      # (M, 3D)

    # key-validity mask generated in-kernel (padded keys -> -inf); no HBM mask
    key_ok = jax.lax.broadcasted_iota(jnp.int32, (1, S_pad), 1) < S
    kmask = jnp.where(key_ok, 0.0, NEG_INF).astype(jnp.float32)   # (1, S_pad)

    samples = []
    for i in range(bb):                      # per-sample attention (no B^2)
        r0 = i * S_pad
        heads = []
        for h in range(H):                   # static lane slices, no einshape
            qh = qkv[r0:r0 + S_pad, h * hd:(h + 1) * hd]
            kh = qkv[r0:r0 + S_pad, D + h * hd:D + (h + 1) * hd]
            vh = qkv[r0:r0 + S_pad, 2 * D + h * hd:2 * D + (h + 1) * hd]
            # q @ k^T via contracting dims (no materialized transpose)
            s = jax.lax.dot_general(qh, kh, (((1,), (1,)), ((), ())),
                                    preferred_element_type=jnp.float32)
            s = s + kmask
            s = s - jnp.max(s, axis=-1, keepdims=True)
            p = jnp.exp(s)
            p = p / jnp.sum(p, axis=-1, keepdims=True)   # exact softmax
            heads.append(jnp.dot(p, vh, preferred_element_type=jnp.float32))
        samples.append(heads[0] if H == 1 else jnp.concatenate(heads, axis=-1))
    attn = samples[0] if bb == 1 else jnp.concatenate(samples, axis=0)  # (M,D)

    x = x + jnp.dot(attn.astype(cdt), wout_ref[0],
                    preferred_element_type=jnp.float32) + bout

    # ------------------------------ feed-forward ------------------------------
    xn2 = _layernorm(x, g2, b2)
    h1 = jnp.dot(xn2.astype(cdt), w1_ref[0],
                 preferred_element_type=jnp.float32) + bfc1
    h1 = _gelu(h1)
    x = x + jnp.dot(h1.astype(cdt), w2_ref[0],
                    preferred_element_type=jnp.float32) + bfc2

    tok_ref[...] = x.reshape(bb, S_pad, D)

    # ---------- final LayerNorm + classifier head on cls row (last step) ------
    @pl.when(l == pl.num_programs(1) - 1)
    def _head():
        rows = [x[i * S_pad:i * S_pad + 1, :] for i in range(bb)]
        cls_tok = rows[0] if bb == 1 else jnp.concatenate(rows, axis=0)  # (bb,D)
        cn = _layernorm(cls_tok, ng_ref[...], nb_ref[...])
        out_ref[0] = (jnp.dot(cn.astype(cdt), hw_ref[...],
                              preferred_element_type=jnp.float32)
                      + hb_ref[...])


# ------------------------------ full ViT forward -------------------------------

def vit_forward(x, params, *, patch_size, num_heads, batch_block=1,
                compute_dtype=jnp.float32):
    B, C, Himg, Wimg = x.shape
    ps = patch_size
    nh, nw = Himg // ps, Wimg // ps
    NP = nh * nw
    pd = ps * ps * C
    D = params["proj_w"].shape[1]
    H = num_heads
    hd = D // H
    S = NP + 1
    S_pad = ((S + 7) // 8) * 8
    lp = params["layers"]
    L = lp["wqkv"].shape[0]
    F = lp["w1"].shape[2]
    C_out = params["head_w"].shape[1]
    C_pad = ((C_out + 127) // 128) * 128
    bb = batch_block
    assert B % bb == 0, "batch must be divisible by batch_block"
    nb = B // bb
    cdt = jnp.dtype(compute_dtype)

    # --- patch extraction (pure data movement, mirrors torch view/permute) ---
    xp = x.reshape(B, C, nh, ps, nw, ps)
    xp = jnp.transpose(xp, (0, 2, 4, 3, 5, 1))
    patches = xp.reshape(B, NP, pd).astype(jnp.float32)

    # --- one-time host-side weight prep (outside the kernel) -----------------
    # Fold 1/sqrt(head_dim) into the q columns of the qkv projection.
    # wqkv column layout is [q_h0..q_hH | k_h0.. | v_h0..] (q|k|v outer,
    # head-major inner) which matches torch's qkv.reshape(B, S, 3, H, hd);
    # torch weights export as  wqkv = qkv.weight.T  (shape (D, 3D)).
    qscale = jnp.concatenate([jnp.full((D,), hd ** -0.5, jnp.float32),
                              jnp.ones((2 * D,), jnp.float32)])
    wqkv = (lp["wqkv"] * qscale).astype(cdt)
    bqkv = lp["bqkv"] * qscale

    # Pack the 8 small per-layer vectors into one (L, 8, Pmax) array -> a
    # single DMA per layer step instead of eight tiny ones.
    Pmax = ((max(3 * D, F) + 127) // 128) * 128

    def _row(a):
        return jnp.pad(a, ((0, 0), (0, 0), (0, Pmax - a.shape[-1])))

    small = jnp.concatenate(
        [_row(lp["g1"]), _row(lp["b1"]), _row(lp["g2"]), _row(lp["b2"]),
         _row(lp["bout"]), _row(lp["bb2"]), _row(bqkv), _row(lp["bb1"])],
        axis=1).astype(jnp.float32)                                # (L, 8, Pmax)

    wout = lp["wout"].astype(cdt)
    w1 = lp["w1"].astype(cdt)
    w2 = lp["w2"].astype(cdt)
    proj_w = params["proj_w"].astype(cdt)
    proj_b = params["proj_b"].reshape(1, D).astype(jnp.float32)
    cls = params["cls_token"].reshape(1, D).astype(jnp.float32)
    pos = jnp.pad(params["pos_embedding"].reshape(S, D),
                  ((0, S_pad - S), (0, 0))).astype(jnp.float32)
    norm_g = params["norm_g"].reshape(1, D).astype(jnp.float32)
    norm_b = params["norm_b"].reshape(1, D).astype(jnp.float32)
    head_w = jnp.pad(params["head_w"], ((0, 0), (0, C_pad - C_out))).astype(cdt)
    head_b = jnp.pad(params["head_b"].reshape(1, C_out),
                     ((0, 0), (0, C_pad - C_out))).astype(jnp.float32)

    def const_spec(a):
        zeros = (0,) * a.ndim
        return pl.BlockSpec(a.shape, lambda b, l: zeros)

    def layer_spec(a):
        tail = (0,) * (a.ndim - 1)
        return pl.BlockSpec((1,) + a.shape[1:], lambda b, l: (l,) + tail)

    in_specs = (
        [pl.BlockSpec((bb, NP, pd), lambda b, l: (b, 0, 0))]          # patches
        + [const_spec(a) for a in (proj_w, proj_b, cls, pos)]
        + [layer_spec(a) for a in (small, wqkv, wout, w1, w2)]
        + [const_spec(a) for a in (norm_g, norm_b, head_w, head_b)])

    out_spec = pl.BlockSpec((1, bb, C_pad), lambda b, l: (b, 0, 0))

    # scoped-VMEM limit sized to the actual working set (defaults of 16/32 MiB
    # can be exceeded long before physical VMEM at real model sizes).
    def nbytes(shape, dt):
        return math.prod(shape) * jnp.dtype(dt).itemsize

    blk_bytes = (nbytes((bb, NP, pd), jnp.float32)
                 + nbytes((pd, D), cdt) + 3 * nbytes((1, D), jnp.float32)
                 + nbytes((S_pad, D), jnp.float32)
                 + nbytes((8, Pmax), jnp.float32)
                 + nbytes((D, 3 * D), cdt) + nbytes((D, D), cdt)
                 + nbytes((D, F), cdt) + nbytes((F, D), cdt)
                 + 2 * nbytes((1, D), jnp.float32)
                 + nbytes((D, C_pad), cdt) + nbytes((1, C_pad), jnp.float32)
                 + nbytes((bb, C_pad), jnp.float32))
    act_bytes = 8 * bb * S_pad * max(3 * D, F, C_pad, 128) * 4
    scratch_bytes = nbytes((bb, S_pad, D), jnp.float32)
    vmem_limit = int(min(100 * 2 ** 20,
                         max(32 * 2 ** 20,
                             2 * (2 * blk_bytes + scratch_bytes + act_bytes))))

    kernel = functools.partial(_vit_kernel, bb, NP, S, S_pad, D, F, H, cdt)
    out = pl.pallas_call(
        kernel,
        out_shape=jax.ShapeDtypeStruct((nb, bb, C_pad), jnp.float32),
        grid=(nb, L),
        in_specs=in_specs,
        out_specs=out_spec,
        scratch_shapes=[pltpu.VMEM((bb, S_pad, D), jnp.float32)],
        compiler_params=pltpu.CompilerParams(
            dimension_semantics=("parallel", "arbitrary"),
            vmem_limit_bytes=vmem_limit),
    )(patches, proj_w, proj_b, cls, pos,
      small, wqkv, wout, w1, w2,
      norm_g, norm_b, head_w, head_b)

    return out.reshape(B, C_pad)[:, :C_out]


# ------------------------------- parameter init --------------------------------

def init_params(key, *, num_patches, patch_dim, d_model, num_layers,
                ffn_dim, num_classes):
    D, F, L = d_model, ffn_dim, num_layers
    keys = iter(jax.random.split(key, 8))

    def nrm(shape, scale=0.02):
        return (scale * jax.random.normal(next(keys), shape)).astype(jnp.float32)

    return {
        "proj_w": nrm((patch_dim, D)),
        "proj_b": jnp.zeros((D,), jnp.float32),
        "cls_token": nrm((1, 1, D), 1.0),
        "pos_embedding": nrm((1, num_patches + 1, D), 1.0),
        "norm_g": jnp.ones((D,), jnp.float32),
        "norm_b": jnp.zeros((D,), jnp.float32),
        "head_w": nrm((D, num_classes)),
        "head_b": jnp.zeros((num_classes,), jnp.float32),
        # per-layer weights stacked along a leading layer axis
        "layers": {
            "g1": jnp.ones((L, 1, D), jnp.float32),
            "b1": jnp.zeros((L, 1, D), jnp.float32),
            "wqkv": nrm((L, D, 3 * D)),
            "bqkv": jnp.zeros((L, 1, 3 * D), jnp.float32),
            "wout": nrm((L, D, D)),
            "bout": jnp.zeros((L, 1, D), jnp.float32),
            "g2": jnp.ones((L, 1, D), jnp.float32),
            "b2": jnp.zeros((L, 1, D), jnp.float32),
            "w1": nrm((L, D, F)),
            "bb1": jnp.zeros((L, 1, F), jnp.float32),
            "w2": nrm((L, F, D)),
            "bb2": jnp.zeros((L, 1, D), jnp.float32),
        },
    }


# ------------------------------------ main -------------------------------------

if __name__ == "__main__":
    # small ViT config
    image_size, patch_size, channels = 16, 4, 4
    d_model, num_heads, num_layers = 32, 4, 2
    ffn_dim, num_classes = 64, 10
    batch = 2
    num_patches = (image_size // patch_size) ** 2        # 16
    patch_dim = patch_size * patch_size * channels       # 64

    key = jax.random.PRNGKey(0)
    k_x, k_p = jax.random.split(key)
    x = jax.random.normal(k_x, (batch, channels, image_size, image_size),
                          dtype=jnp.float32)             # NCHW like torch

    params = init_params(k_p, num_patches=num_patches, patch_dim=patch_dim,
                         d_model=d_model, num_layers=num_layers,
                         ffn_dim=ffn_dim, num_classes=num_classes)

    fwd = jax.jit(functools.partial(vit_forward, patch_size=patch_size,
                                    num_heads=num_heads, batch_block=1,
                                    compute_dtype=jnp.float32))
    out = fwd(x, params)
    out = jax.block_until_ready(out)
    assert out.shape == (batch, num_classes), out.shape
    assert bool(jnp.all(jnp.isfinite(out))), "non-finite output"
    print("KERNEL_OK")
</pallas_src>

<mosaic_0001>
module attributes {stable_mosaic.version = 11 : i64} {
  func.func @_vit_kernel(%arg0: i32, %arg1: i32, %arg2: memref<1x16x64xf32, #tpu.memory_space<vmem>>, %arg3: memref<64x32xf32, #tpu.memory_space<vmem>>, %arg4: memref<1x32xf32, #tpu.memory_space<vmem>>, %arg5: memref<1x32xf32, #tpu.memory_space<vmem>>, %arg6: memref<24x32xf32, #tpu.memory_space<vmem>>, %arg7: memref<1x8x128xf32, #tpu.memory_space<vmem>>, %arg8: memref<1x32x96xf32, #tpu.memory_space<vmem>>, %arg9: memref<1x32x32xf32, #tpu.memory_space<vmem>>, %arg10: memref<1x32x64xf32, #tpu.memory_space<vmem>>, %arg11: memref<1x64x32xf32, #tpu.memory_space<vmem>>, %arg12: memref<1x32xf32, #tpu.memory_space<vmem>>, %arg13: memref<1x32xf32, #tpu.memory_space<vmem>>, %arg14: memref<32x128xf32, #tpu.memory_space<vmem>>, %arg15: memref<1x128xf32, #tpu.memory_space<vmem>>, %arg16: memref<1x1x128xf32, #tpu.memory_space<vmem>>, %arg17: memref<1x24x32xf32, #tpu.memory_space<vmem>>) attributes {dimension_semantics = [#tpu.dimension_semantics<parallel>, #tpu.dimension_semantics<arbitrary>], iteration_bounds = array<i64: 2, 2>, scalar_prefetch = 0 : i64, scratch_operands = 1 : i64, tpu.core_type = #tpu.core_type<tc>, window_params = [{transform_indices = @transform_0, window_bounds = array<i64: 1, 16, 64>}, {pipeline_mode = #tpu.pipeline_mode<synchronous>, transform_indices = @transform_1, window_bounds = array<i64: 64, 32>}, {pipeline_mode = #tpu.pipeline_mode<synchronous>, transform_indices = @transform_2, window_bounds = array<i64: 1, 32>}, {pipeline_mode = #tpu.pipeline_mode<synchronous>, transform_indices = @transform_3, window_bounds = array<i64: 1, 32>}, {pipeline_mode = #tpu.pipeline_mode<synchronous>, transform_indices = @transform_4, window_bounds = array<i64: 24, 32>}, {transform_indices = @transform_5, window_bounds = array<i64: 1, 8, 128>}, {transform_indices = @transform_6, window_bounds = array<i64: 1, 32, 96>}, {transform_indices = @transform_7, window_bounds = array<i64: 1, 32, 32>}, {transform_indices = @transform_8, window_bounds = array<i64: 1, 32, 64>}, {transform_indices = @transform_9, window_bounds = array<i64: 1, 64, 32>}, {pipeline_mode = #tpu.pipeline_mode<synchronous>, transform_indices = @transform_10, window_bounds = array<i64: 1, 32>}, {pipeline_mode = #tpu.pipeline_mode<synchronous>, transform_indices = @transform_11, window_bounds = array<i64: 1, 32>}, {pipeline_mode = #tpu.pipeline_mode<synchronous>, transform_indices = @transform_12, window_bounds = array<i64: 32, 128>}, {pipeline_mode = #tpu.pipeline_mode<synchronous>, transform_indices = @transform_13, window_bounds = array<i64: 1, 128>}, {transform_indices = @transform_14, window_bounds = array<i64: 1, 1, 128>}]} {
    %c0_i32 = arith.constant 0 : i32
    %0 = arith.cmpi eq, %arg1, %c0_i32 : i32
    %1 = arith.extui %0 : i1 to i32
    %c0_i32_0 = arith.constant 0 : i32
    %2 = arith.cmpi ne, %1, %c0_i32_0 : i32
    scf.if %2 {
      %c0_69 = arith.constant 0 : index
      %c0_70 = arith.constant 0 : index
      %c0_71 = arith.constant 0 : index
      %198 = vector.load %arg2[%c0_69, %c0_70, %c0_71] : memref<1x16x64xf32, #tpu.memory_space<vmem>>, vector<1x16x64xf32>
      %199 = vector.shape_cast %198 : vector<1x16x64xf32> to vector<16x64xf32>
      %c0_72 = arith.constant 0 : index
      %c0_73 = arith.constant 0 : index
      %200 = vector.load %arg3[%c0_72, %c0_73] : memref<64x32xf32, #tpu.memory_space<vmem>>, vector<64x32xf32>
      %cst_74 = arith.constant dense<0.000000e+00> : vector<16x32xf32>
      %201 = tpu.matmul %199, %200, %cst_74 {dimension_numbers = #tpu.dot_dimension_numbers<[1], [0], [0], [1], [0, 0, 1, 1], [], []>} : vector<16x64xf32>, vector<64x32xf32>, vector<16x32xf32> -> vector<16x32xf32>
      %c0_75 = arith.constant 0 : index
      %c0_76 = arith.constant 0 : index
      %202 = vector.load %arg4[%c0_75, %c0_76] : memref<1x32xf32, #tpu.memory_space<vmem>>, vector<1x32xf32>
      %203 = vector.broadcast %202 : vector<1x32xf32> to vector<16x32xf32>
      %204 = arith.addf %201, %203 : vector<16x32xf32>
      %205 = vector.shape_cast %204 : vector<16x32xf32> to vector<1x16x32xf32>
      %c0_77 = arith.constant 0 : index
      %c0_78 = arith.constant 0 : index
      %206 = vector.load %arg5[%c0_77, %c0_78] : memref<1x32xf32, #tpu.memory_space<vmem>>, vector<1x32xf32>
      %c0_79 = arith.constant 0 : index
      %c0_80 = arith.constant 0 : index
      %207 = vector.load %arg6[%c0_79, %c0_80] : memref<24x32xf32, #tpu.memory_space<vmem>>, vector<1x32xf32>
      %208 = arith.addf %206, %207 : vector<1x32xf32>
      %209 = vector.shape_cast %208 : vector<1x32xf32> to vector<1x1x32xf32>
      %c0_81 = arith.constant 0 : index
      %c0_82 = arith.constant 0 : index
      %c0_83 = arith.constant 0 : index
      %210 = vector.load %arg17[%c0_81, %c0_82, %c0_83] : memref<1x24x32xf32, #tpu.memory_space<vmem>>, vector<1x1x32xf32>
      tpu.vector_store %arg17[%c0_81, %c0_82, %c0_83], %209 {strides = array<i32>} : memref<1x24x32xf32, #tpu.memory_space<vmem>>, vector<1x1x32xf32>,
      %c1 = arith.constant 1 : index
      %c0_84 = arith.constant 0 : index
      %211 = vector.load %arg6[%c1, %c0_84] : memref<24x32xf32, #tpu.memory_space<vmem>>, vector<16x32xf32>
      %212 = vector.shape_cast %211 : vector<16x32xf32> to vector<1x16x32xf32>
      %213 = arith.addf %205, %212 : vector<1x16x32xf32>
      %c0_85 = arith.constant 0 : index
      %c1_86 = arith.constant 1 : index
      %c0_87 = arith.constant 0 : index
      %214 = vector.load %arg17[%c0_85, %c1_86, %c0_87] : memref<1x24x32xf32, #tpu.memory_space<vmem>>, vector<1x16x32xf32>
      tpu.vector_store %arg17[%c0_85, %c1_86, %c0_87], %213 {strides = array<i32>} : memref<1x24x32xf32, #tpu.memory_space<vmem>>, vector<1x16x32xf32>,
      %cst_88 = arith.constant 0.000000e+00 : f32
      %215 = vector.broadcast %cst_88 : f32 to vector<1x7x32xf32>
      %c0_89 = arith.constant 0 : index
      %c17 = arith.constant 17 : index
      %c0_90 = arith.constant 0 : index
      %216 = vector.load %arg17[%c0_89, %c17, %c0_90] : memref<1x24x32xf32, #tpu.memory_space<vmem>>, vector<1x7x32xf32>
      tpu.vector_store %arg17[%c0_89, %c17, %c0_90], %215 {strides = array<i32>} : memref<1x24x32xf32, #tpu.memory_space<vmem>>, vector<1x7x32xf32>,
    } else {
    }
    %c0 = arith.constant 0 : index
    %c0_1 = arith.constant 0 : index
    %c0_2 = arith.constant 0 : index
    %3 = vector.load %arg7[%c0, %c0_1, %c0_2] : memref<1x8x128xf32, #tpu.memory_space<vmem>>, vector<1x8x128xf32>
    %4 = vector.shape_cast %3 : vector<1x8x128xf32> to vector<8x128xf32>
    %5 = vector.extract_strided_slice %4 {offsets = [0, 0], sizes = [1, 32], strides = [1, 1]} : vector<8x128xf32> to vector<1x32xf32>
    %6 = vector.extract_strided_slice %4 {offsets = [1, 0], sizes = [1, 32], strides = [1, 1]} : vector<8x128xf32> to vector<1x32xf32>
    %7 = vector.extract_strided_slice %4 {offsets = [2, 0], sizes = [1, 32], strides = [1, 1]} : vector<8x128xf32> to vector<1x32xf32>
    %8 = vector.extract_strided_slice %4 {offsets = [3, 0], sizes = [1, 32], strides = [1, 1]} : vector<8x128xf32> to vector<1x32xf32>
    %9 = vector.extract_strided_slice %4 {offsets = [4, 0], sizes = [1, 32], strides = [1, 1]} : vector<8x128xf32> to vector<1x32xf32>
    %10 = vector.extract_strided_slice %4 {offsets = [5, 0], sizes = [1, 32], strides = [1, 1]} : vector<8x128xf32> to vector<1x32xf32>
    %11 = vector.extract_strided_slice %4 {offsets = [6, 0], sizes = [1, 96], strides = [1, 1]} : vector<8x128xf32> to vector<1x96xf32>
    %12 = vector.extract_strided_slice %4 {offsets = [7, 0], sizes = [1, 64], strides = [1, 1]} : vector<8x128xf32> to vector<1x64xf32>
    %c0_3 = arith.constant 0 : index
    %c0_4 = arith.constant 0 : index
    %c0_5 = arith.constant 0 : index
    %13 = vector.load %arg17[%c0_3, %c0_4, %c0_5] : memref<1x24x32xf32, #tpu.memory_space<vmem>>, vector<1x24x32xf32>
    %14 = vector.shape_cast %13 : vector<1x24x32xf32> to vector<24x32xf32>
    %cst = arith.constant dense<0.000000e+00> : vector<24xf32>
    %15 = vector.multi_reduction <add>, %14, %cst [1] : vector<24x32xf32> to vector<24xf32>
    %16 = vector.shape_cast %15 : vector<24xf32> to vector<24x1xf32>
    %cst_6 = arith.constant 3.200000e+01 : f32
    %17 = vector.broadcast %cst_6 : f32 to vector<24x1xf32>
    %18 = arith.divf %16, %17 : vector<24x1xf32>
    %19 = vector.broadcast %18 : vector<24x1xf32> to vector<24x32xf32>
    %20 = arith.subf %14, %19 : vector<24x32xf32>
    %21 = arith.mulf %20, %20 : vector<24x32xf32>
    %cst_7 = arith.constant dense<0.000000e+00> : vector<24xf32>
    %22 = vector.multi_reduction <add>, %21, %cst_7 [1] : vector<24x32xf32> to vector<24xf32>
    %23 = vector.shape_cast %22 : vector<24xf32> to vector<24x1xf32>
    %cst_8 = arith.constant 3.200000e+01 : f32
    %24 = vector.broadcast %cst_8 : f32 to vector<24x1xf32>
    %25 = arith.divf %23, %24 : vector<24x1xf32>
    %26 = vector.broadcast %18 : vector<24x1xf32> to vector<24x32xf32>
    %27 = arith.subf %14, %26 : vector<24x32xf32>
    %cst_9 = arith.constant 9.99999974E-6 : f32
    %28 = vector.broadcast %cst_9 : f32 to vector<24x1xf32>
    %29 = arith.addf %25, %28 : vector<24x1xf32>
    %30 = math.rsqrt %29 : vector<24x1xf32>
    %31 = vector.broadcast %30 : vector<24x1xf32> to vector<24x32xf32>
    %32 = arith.mulf %27, %31 : vector<24x32xf32>
    %33 = vector.broadcast %5 : vector<1x32xf32> to vector<24x32xf32>
    %34 = arith.mulf %32, %33 : vector<24x32xf32>
    %35 = vector.broadcast %6 : vector<1x32xf32> to vector<24x32xf32>
    %36 = arith.addf %34, %35 : vector<24x32xf32>
    %c0_10 = arith.constant 0 : index
    %c0_11 = arith.constant 0 : index
    %c0_12 = arith.constant 0 : index
    %37 = vector.load %arg8[%c0_10, %c0_11, %c0_12] : memref<1x32x96xf32, #tpu.memory_space<vmem>>, vector<1x32x96xf32>
    %38 = vector.shape_cast %37 : vector<1x32x96xf32> to vector<32x96xf32>
    %cst_13 = arith.constant dense<0.000000e+00> : vector<24x96xf32>
    %39 = tpu.matmul %36, %38, %cst_13 {dimension_numbers = #tpu.dot_dimension_numbers<[1], [0], [0], [1], [0, 0, 1, 1], [], []>} : vector<24x32xf32>, vector<32x96xf32>, vector<24x96xf32> -> vector<24x96xf32>
    %40 = vector.broadcast %11 : vector<1x96xf32> to vector<24x96xf32>
    %41 = arith.addf %39, %40 : vector<24x96xf32>
    %42 = tpu.iota {dimensions = array<i32: 1>} : vector<1x24xi32>
    %c17_i32 = arith.constant 17 : i32
    %43 = vector.broadcast %c17_i32 : i32 to vector<1x24xi32>
    %44 = arith.cmpi slt, %42, %43 : vector<1x24xi32>
    %cst_14 = arith.constant 0.000000e+00 : f32
    %cst_15 = arith.constant -1.000000e+30 : f32
    %45 = vector.broadcast %cst_14 : f32 to vector<1x24xf32>
    %46 = vector.broadcast %cst_15 : f32 to vector<1x24xf32>
    %47 = arith.select %44, %45, %46 : vector<1x24xi1>, vector<1x24xf32>
    %48 = vector.extract_strided_slice %41 {offsets = [0, 0], sizes = [24, 8], strides = [1, 1]} : vector<24x96xf32> to vector<24x8xf32>
    %49 = vector.extract_strided_slice %41 {offsets = [0, 32], sizes = [24, 8], strides = [1, 1]} : vector<24x96xf32> to vector<24x8xf32>
    %50 = vector.extract_strided_slice %41 {offsets = [0, 64], sizes = [24, 8], strides = [1, 1]} : vector<24x96xf32> to vector<24x8xf32>
    %cst_16 = arith.constant dense<0.000000e+00> : vector<24x24xf32>
    %51 = tpu.matmul %48, %49, %cst_16 {dimension_numbers = #tpu.dot_dimension_numbers<[1], [1], [0], [0], [0, 0, 1, 0], [], []>} : vector<24x8xf32>, vector<24x8xf32>, vector<24x24xf32> -> vector<24x24xf32>
    %52 = vector.broadcast %47 : vector<1x24xf32> to vector<24x24xf32>
    %53 = arith.addf %51, %52 : vector<24x24xf32>
    %cst_17 = arith.constant dense<0xFF800000> : vector<24xf32>
    %54 = vector.multi_reduction <maximumf>, %53, %cst_17 [1] : vector<24x24xf32> to vector<24xf32>
    %55 = vector.shape_cast %54 : vector<24xf32> to vector<24x1xf32>
    %56 = vector.broadcast %55 : vector<24x1xf32> to vector<24x24xf32>
    %57 = arith.subf %53, %56 : vector<24x24xf32>
    %58 = math.exp %57 : vector<24x24xf32>
    %cst_18 = arith.constant dense<0.000000e+00> : vector<24xf32>
    %59 = vector.multi_reduction <add>, %58, %cst_18 [1] : vector<24x24xf32> to vector<24xf32>
    %60 = vector.shape_cast %59 : vector<24xf32> to vector<24x1xf32>
    %61 = vector.broadcast %60 : vector<24x1xf32> to vector<24x24xf32>
    %62 = arith.divf %58, %61 : vector<24x24xf32>
    %cst_19 = arith.constant dense<0.000000e+00> : vector<24x8xf32>
    %63 = tpu.matmul %62, %50, %cst_19 {dimension_numbers = #tpu.dot_dimension_numbers<[1], [0], [0], [1], [0, 0, 1, 1], [], []>} : vector<24x24xf32>, vector<24x8xf32>, vector<24x8xf32> -> vector<24x8xf32>
    %64 = vector.extract_strided_slice %41 {offsets = [0, 8], sizes = [24, 8], strides = [1, 1]} : vector<24x96xf32> to vector<24x8xf32>
    %65 = vector.extract_strided_slice %41 {offsets = [0, 40], sizes = [24, 8], strides = [1, 1]} : vector<24x96xf32> to vector<24x8xf32>
    %66 = vector.extract_strided_slice %41 {offsets = [0, 72], sizes = [24, 8], strides = [1, 1]} : vector<24x96xf32> to vector<24x8xf32>
    %cst_20 = arith.constant dense<0.000000e+00> : vector<24x24xf32>
    %67 = tpu.matmul %64, %65, %cst_20 {dimension_numbers = #tpu.dot_dimension_numbers<[1], [1], [0], [0], [0, 0, 1, 0], [], []>} : vector<24x8xf32>, vector<24x8xf32>, vector<24x24xf32> -> vector<24x24xf32>
    %68 = vector.broadcast %47 : vector<1x24xf32> to vector<24x24xf32>
    %69 = arith.addf %67, %68 : vector<24x24xf32>
    %cst_21 = arith.constant dense<0xFF800000> : vector<24xf32>
    %70 = vector.multi_reduction <maximumf>, %69, %cst_21 [1] : vector<24x24xf32> to vector<24xf32>
    %71 = vector.shape_cast %70 : vector<24xf32> to vector<24x1xf32>
    %72 = vector.broadcast %71 : vector<24x1xf32> to vector<24x24xf32>
    %73 = arith.subf %69, %72 : vector<24x24xf32>
    %74 = math.exp %73 : vector<24x24xf32>
    %cst_22 = arith.constant dense<0.000000e+00> : vector<24xf32>
    %75 = vector.multi_reduction <add>, %74, %cst_22 [1] : vector<24x24xf32> to vector<24xf32>
    %76 = vector.shape_cast %75 : vector<24xf32> to vector<24x1xf32>
    %77 = vector.broadcast %76 : vector<24x1xf32> to vector<24x24xf32>
    %78 = arith.divf %74, %77 : vector<24x24xf32>
    %cst_23 = arith.constant dense<0.000000e+00> : vector<24x8xf32>
    %79 = tpu.matmul %78, %66, %cst_23 {dimension_numbers = #tpu.dot_dimension_numbers<[1], [0], [0], [1], [0, 0, 1, 1], [], []>} : vector<24x24xf32>, vector<24x8xf32>, vector<24x8xf32> -> vector<24x8xf32>
    %80 = vector.extract_strided_slice %41 {offsets = [0, 16], sizes = [24, 8], strides = [1, 1]} : vector<24x96xf32> to vector<24x8xf32>
    %81 = vector.extract_strided_slice %41 {offsets = [0, 48], sizes = [24, 8], strides = [1, 1]} : vector<24x96xf32> to vector<24x8xf32>
    %82 = vector.extract_strided_slice %41 {offsets = [0, 80], sizes = [24, 8], strides = [1, 1]} : vector<24x96xf32> to vector<24x8xf32>
    %cst_24 = arith.constant dense<0.000000e+00> : vector<24x24xf32>
    %83 = tpu.matmul %80, %81, %cst_24 {dimension_numbers = #tpu.dot_dimension_numbers<[1], [1], [0], [0], [0, 0, 1, 0], [], []>} : vector<24x8xf32>, vector<24x8xf32>, vector<24x24xf32> -> vector<24x24xf32>
    %84 = vector.broadcast %47 : vector<1x24xf32> to vector<24x24xf32>
    %85 = arith.addf %83, %84 : vector<24x24xf32>
    %cst_25 = arith.constant dense<0xFF800000> : vector<24xf32>
    %86 = vector.multi_reduction <maximumf>, %85, %cst_25 [1] : vector<24x24xf32> to vector<24xf32>
    %87 = vector.shape_cast %86 : vector<24xf32> to vector<24x1xf32>
    %88 = vector.broadcast %87 : vector<24x1xf32> to vector<24x24xf32>
    %89 = arith.subf %85, %88 : vector<24x24xf32>
    %90 = math.exp %89 : vector<24x24xf32>
    %cst_26 = arith.constant dense<0.000000e+00> : vector<24xf32>
    %91 = vector.multi_reduction <add>, %90, %cst_26 [1] : vector<24x24xf32> to vector<24xf32>
    %92 = vector.shape_cast %91 : vector<24xf32> to vector<24x1xf32>
    %93 = vector.broadcast %92 : vector<24x1xf32> to vector<24x24xf32>
    %94 = arith.divf %90, %93 : vector<24x24xf32>
    %cst_27 = arith.constant dense<0.000000e+00> : vector<24x8xf32>
    %95 = tpu.matmul %94, %82, %cst_27 {dimension_numbers = #tpu.dot_dimension_numbers<[1], [0], [0], [1], [0, 0, 1, 1], [], []>} : vector<24x24xf32>, vector<24x8xf32>, vector<24x8xf32> -> vector<24x8xf32>
    %96 = vector.extract_strided_slice %41 {offsets = [0, 24], sizes = [24, 8], strides = [1, 1]} : vector<24x96xf32> to vector<24x8xf32>
    %97 = vector.extract_strided_slice %41 {offsets = [0, 56], sizes = [24, 8], strides = [1, 1]} : vector<24x96xf32> to vector<24x8xf32>
    %98 = vector.extract_strided_slice %41 {offsets = [0, 88], sizes = [24, 8], strides = [1, 1]} : vector<24x96xf32> to vector<24x8xf32>
    %cst_28 = arith.constant dense<0.000000e+00> : vector<24x24xf32>
    %99 = tpu.matmul %96, %97, %cst_28 {dimension_numbers = #tpu.dot_dimension_numbers<[1], [1], [0], [0], [0, 0, 1, 0], [], []>} : vector<24x8xf32>, vector<24x8xf32>, vector<24x24xf32> -> vector<24x24xf32>
    %100 = vector.broadcast %47 : vector<1x24xf32> to vector<24x24xf32>
    %101 = arith.addf %99, %100 : vector<24x24xf32>
    %cst_29 = arith.constant dense<0xFF800000> : vector<24xf32>
    %102 = vector.multi_reduction <maximumf>, %101, %cst_29 [1] : vector<24x24xf32> to vector<24xf32>
    %103 = vector.shape_cast %102 : vector<24xf32> to vector<24x1xf32>
    %104 = vector.broadcast %103 : vector<24x1xf32> to vector<24x24xf32>
    %105 = arith.subf %101, %104 : vector<24x24xf32>
    %106 = math.exp %105 : vector<24x24xf32>
    %cst_30 = arith.constant dense<0.000000e+00> : vector<24xf32>
    %107 = vector.multi_reduction <add>, %106, %cst_30 [1] : vector<24x24xf32> to vector<24xf32>
    %108 = vector.shape_cast %107 : vector<24xf32> to vector<24x1xf32>
    %109 = vector.broadcast %108 : vector<24x1xf32> to vector<24x24xf32>
    %110 = arith.divf %106, %109 : vector<24x24xf32>
    %cst_31 = arith.constant dense<0.000000e+00> : vector<24x8xf32>
    %111 = tpu.matmul %110, %98, %cst_31 {dimension_numbers = #tpu.dot_dimension_numbers<[1], [0], [0], [1], [0, 0, 1, 1], [], []>} : vector<24x24xf32>, vector<24x8xf32>, vector<24x8xf32> -> vector<24x8xf32>
    %112 = tpu.concatenate %63, %79, %95, %111 in 1 : vector<24x8xf32>, vector<24x8xf32>, vector<24x8xf32>, vector<24x8xf32> -> vector<24x32xf32>
    %c0_32 = arith.constant 0 : index
    %c0_33 = arith.constant 0 : index
    %c0_34 = arith.constant 0 : index
    %113 = vector.load %arg9[%c0_32, %c0_33, %c0_34] : memref<1x32x32xf32, #tpu.memory_space<vmem>>, vector<1x32x32xf32>
    %114 = vector.shape_cast %113 : vector<1x32x32xf32> to vector<32x32xf32>
    %cst_35 = arith.constant dense<0.000000e+00> : vector<24x32xf32>
    %115 = tpu.matmul %112, %114, %cst_35 {dimension_numbers = #tpu.dot_dimension_numbers<[1], [0], [0], [1], [0, 0, 1, 1], [], []>} : vector<24x32xf32>, vector<32x32xf32>, vector<24x32xf32> -> vector<24x32xf32>
    %116 = arith.addf %14, %115 : vector<24x32xf32>
    %117 = vector.broadcast %9 : vector<1x32xf32> to vector<24x32xf32>
    %118 = arith.addf %116, %117 : vector<24x32xf32>
    %cst_36 = arith.constant dense<0.000000e+00> : vector<24xf32>
    %119 = vector.multi_reduction <add>, %118, %cst_36 [1] : vector<24x32xf32> to vector<24xf32>
    %120 = vector.shape_cast %119 : vector<24xf32> to vector<24x1xf32>
    %cst_37 = arith.constant 3.200000e+01 : f32
    %121 = vector.broadcast %cst_37 : f32 to vector<24x1xf32>
    %122 = arith.divf %120, %121 : vector<24x1xf32>
    %123 = vector.broadcast %122 : vector<24x1xf32> to vector<24x32xf32>
    %124 = arith.subf %118, %123 : vector<24x32xf32>
    %125 = arith.mulf %124, %124 : vector<24x32xf32>
    %cst_38 = arith.constant dense<0.000000e+00> : vector<24xf32>
    %126 = vector.multi_reduction <add>, %125, %cst_38 [1] : vector<24x32xf32> to vector<24xf32>
    %127 = vector.shape_cast %126 : vector<24xf32> to vector<24x1xf32>
    %cst_39 = arith.constant 3.200000e+01 : f32
    %128 = vector.broadcast %cst_39 : f32 to vector<24x1xf32>
    %129 = arith.divf %127, %128 : vector<24x1xf32>
    %130 = vector.broadcast %122 : vector<24x1xf32> to vector<24x32xf32>
    %131 = arith.subf %118, %130 : vector<24x32xf32>
    %cst_40 = arith.constant 9.99999974E-6 : f32
    %132 = vector.broadcast %cst_40 : f32 to vector<24x1xf32>
    %133 = arith.addf %129, %132 : vector<24x1xf32>
    %134 = math.rsqrt %133 : vector<24x1xf32>
    %135 = vector.broadcast %134 : vector<24x1xf32> to vector<24x32xf32>
    %136 = arith.mulf %131, %135 : vector<24x32xf32>
    %137 = vector.broadcast %7 : vector<1x32xf32> to vector<24x32xf32>
    %138 = arith.mulf %136, %137 : vector<24x32xf32>
    %139 = vector.broadcast %8 : vector<1x32xf32> to vector<24x32xf32>
    %140 = arith.addf %138, %139 : vector<24x32xf32>
    %c0_41 = arith.constant 0 : index
    %c0_42 = arith.constant 0 : index
    %c0_43 = arith.constant 0 : index
    %141 = vector.load %arg10[%c0_41, %c0_42, %c0_43] : memref<1x32x64xf32, #tpu.memory_space<vmem>>, vector<1x32x64xf32>
    %142 = vector.shape_cast %141 : vector<1x32x64xf32> to vector<32x64xf32>
    %cst_44 = arith.constant dense<0.000000e+00> : vector<24x64xf32>
    %143 = tpu.matmul %140, %142, %cst_44 {dimension_numbers = #tpu.dot_dimension_numbers<[1], [0], [0], [1], [0, 0, 1, 1], [], []>} : vector<24x32xf32>, vector<32x64xf32>, vector<24x64xf32> -> vector<24x64xf32>
    %144 = vector.broadcast %12 : vector<1x64xf32> to vector<24x64xf32>
    %145 = arith.addf %143, %144 : vector<24x64xf32>
    %cst_45 = arith.constant 5.000000e-01 : f32
    %146 = vector.broadcast %cst_45 : f32 to vector<24x64xf32>
    %147 = arith.mulf %146, %145 : vector<24x64xf32>
    %cst_46 = arith.constant 0.707106769 : f32
    %148 = vector.broadcast %cst_46 : f32 to vector<24x64xf32>
    %149 = arith.mulf %145, %148 : vector<24x64xf32>
    %cst_47 = arith.constant 0.000000e+00 : f32
    %150 = vector.broadcast %cst_47 : f32 to vector<24x64xf32>
    %151 = arith.cmpf olt, %149, %150 : vector<24x64xf32>
    %cst_48 = arith.constant -1.000000e+00 : f32
    %cst_49 = arith.constant 1.000000e+00 : f32
    %152 = vector.broadcast %cst_48 : f32 to vector<24x64xf32>
    %153 = vector.broadcast %cst_49 : f32 to vector<24x64xf32>
    %154 = arith.select %151, %152, %153 : vector<24x64xi1>, vector<24x64xf32>
    %155 = math.absf %149 : vector<24x64xf32>
    %cst_50 = arith.constant 0.327591091 : f32
    %156 = vector.broadcast %cst_50 : f32 to vector<24x64xf32>
    %157 = arith.mulf %156, %155 : vector<24x64xf32>
    %cst_51 = arith.constant 1.000000e+00 : f32
    %158 = vector.broadcast %cst_51 : f32 to vector<24x64xf32>
    %159 = arith.addf %158, %157 : vector<24x64xf32>
    %cst_52 = arith.constant 1.000000e+00 : f32
    %160 = vector.broadcast %cst_52 : f32 to vector<24x64xf32>
    %161 = arith.divf %160, %159 : vector<24x64xf32>
    %cst_53 = arith.constant 1.06140542 : f32
    %162 = vector.broadcast %cst_53 : f32 to vector<24x64xf32>
    %163 = arith.mulf %162, %161 : vector<24x64xf32>
    %cst_54 = arith.constant -1.45315206 : f32
    %164 = vector.broadcast %cst_54 : f32 to vector<24x64xf32>
    %165 = arith.addf %163, %164 : vector<24x64xf32>
    %166 = arith.mulf %165, %161 : vector<24x64xf32>
    %cst_55 = arith.constant 1.42141378 : f32
    %167 = vector.broadcast %cst_55 : f32 to vector<24x64xf32>
    %168 = arith.addf %166, %167 : vector<24x64xf32>
    %169 = arith.mulf %168, %161 : vector<24x64xf32>
    %cst_56 = arith.constant -0.284496725 : f32
    %170 = vector.broadcast %cst_56 : f32 to vector<24x64xf32>
    %171 = arith.addf %169, %170 : vector<24x64xf32>
    %172 = arith.mulf %171, %161 : vector<24x64xf32>
    %cst_57 = arith.constant 0.254829586 : f32
    %173 = vector.broadcast %cst_57 : f32 to vector<24x64xf32>
    %174 = arith.addf %172, %173 : vector<24x64xf32>
    %175 = arith.mulf %174, %161 : vector<24x64xf32>
    %176 = arith.mulf %155, %155 : vector<24x64xf32>
    %cst_58 = arith.constant 0.000000e+00 : f32
    %177 = vector.broadcast %cst_58 : f32 to vector<24x64xf32>
    %178 = arith.subf %177, %176 : vector<24x64xf32>
    %179 = math.exp %178 : vector<24x64xf32>
    %180 = arith.mulf %175, %179 : vector<24x64xf32>
    %cst_59 = arith.constant 1.000000e+00 : f32
    %181 = vector.broadcast %cst_59 : f32 to vector<24x64xf32>
    %182 = arith.subf %181, %180 : vector<24x64xf32>
    %183 = arith.mulf %154, %182 : vector<24x64xf32>
    %cst_60 = arith.constant 1.000000e+00 : f32
    %184 = vector.broadcast %cst_60 : f32 to vector<24x64xf32>
    %185 = arith.addf %184, %183 : vector<24x64xf32>
    %186 = arith.mulf %147, %185 : vector<24x64xf32>
    %c0_61 = arith.constant 0 : index
    %c0_62 = arith.constant 0 : index
    %c0_63 = arith.constant 0 : index
    %187 = vector.load %arg11[%c0_61, %c0_62, %c0_63] : memref<1x64x32xf32, #tpu.memory_space<vmem>>, vector<1x64x32xf32>
    %188 = vector.shape_cast %187 : vector<1x64x32xf32> to vector<64x32xf32>
    %cst_64 = arith.constant dense<0.000000e+00> : vector<24x32xf32>
    %189 = tpu.matmul %186, %188, %cst_64 {dimension_numbers = #tpu.dot_dimension_numbers<[1], [0], [0], [1], [0, 0, 1, 1], [], []>} : vector<24x64xf32>, vector<64x32xf32>, vector<24x32xf32> -> vector<24x32xf32>
    %190 = arith.addf %118, %189 : vector<24x32xf32>
    %191 = vector.broadcast %10 : vector<1x32xf32> to vector<24x32xf32>
    %192 = arith.addf %190, %191 : vector<24x32xf32>
    %193 = vector.shape_cast %192 : vector<24x32xf32> to vector<1x24x32xf32>
    %c0_65 = arith.constant 0 : index
    %c0_66 = arith.constant 0 : index
    %c0_67 = arith.constant 0 : index
    %194 = vector.load %arg17[%c0_65, %c0_66, %c0_67] : memref<1x24x32xf32, #tpu.memory_space<vmem>>, vector<1x24x32xf32>
    tpu.vector_store %arg17[%c0_65, %c0_66, %c0_67], %193 {strides = array<i32>} : memref<1x24x32xf32, #tpu.memory_space<vmem>>, vector<1x24x32xf32>,
    %c1_i32 = arith.constant 1 : i32
    %195 = arith.cmpi eq, %arg1, %c1_i32 : i32
    %196 = arith.extui %195 : i1 to i32
    %c0_i32_68 = arith.constant 0 : i32
    %197 = arith.cmpi ne, %196, %c0_i32_68 : i32
    scf.if %197 {
      %198 = vector.extract_strided_slice %192 {offsets = [0, 0], sizes = [1, 32], strides = [1, 1]} : vector<24x32xf32> to vector<1x32xf32>
      %c0_69 = arith.constant 0 : index
      %c0_70 = arith.constant 0 : index
      %199 = vector.load %arg12[%c0_69, %c0_70] : memref<1x32xf32, #tpu.memory_space<vmem>>, vector<1x32xf32>
      %c0_71 = arith.constant 0 : index
      %c0_72 = arith.constant 0 : index
      %200 = vector.load %arg13[%c0_71, %c0_72] : memref<1x32xf32, #tpu.memory_space<vmem>>, vector<1x32xf32>
      %cst_73 = arith.constant dense<0.000000e+00> : vector<1xf32>
      %201 = vector.multi_reduction <add>, %198, %cst_73 [1] : vector<1x32xf32> to vector<1xf32>
      %202 = vector.shape_cast %201 : vector<1xf32> to vector<1x1xf32>
      %cst_74 = arith.constant 3.200000e+01 : f32
      %203 = vector.broadcast %cst_74 : f32 to vector<1x1xf32>
      %204 = arith.divf %202, %203 : vector<1x1xf32>
      %205 = vector.broadcast %204 : vector<1x1xf32> to vector<1x32xf32>
      %206 = arith.subf %198, %205 : vector<1x32xf32>
      %207 = arith.mulf %206, %206 : vector<1x32xf32>
      %cst_75 = arith.constant dense<0.000000e+00> : vector<1xf32>
      %208 = vector.multi_reduction <add>, %207, %cst_75 [1] : vector<1x32xf32> to vector<1xf32>
      %209 = vector.shape_cast %208 : vector<1xf32> to vector<1x1xf32>
      %cst_76 = arith.constant 3.200000e+01 : f32
      %210 = vector.broadcast %cst_76 : f32 to vector<1x1xf32>
      %211 = arith.divf %209, %210 : vector<1x1xf32>
      %212 = vector.broadcast %204 : vector<1x1xf32> to vector<1x32xf32>
      %213 = arith.subf %198, %212 : vector<1x32xf32>
      %cst_77 = arith.constant 9.99999974E-6 : f32
      %214 = vector.broadcast %cst_77 : f32 to vector<1x1xf32>
      %215 = arith.addf %211, %214 : vector<1x1xf32>
      %216 = math.rsqrt %215 : vector<1x1xf32>
      %217 = vector.broadcast %216 : vector<1x1xf32> to vector<1x32xf32>
      %218 = arith.mulf %213, %217 : vector<1x32xf32>
      %219 = arith.mulf %218, %199 : vector<1x32xf32>
      %220 = arith.addf %219, %200 : vector<1x32xf32>
      %c0_78 = arith.constant 0 : index
      %c0_79 = arith.constant 0 : index
      %221 = vector.load %arg14[%c0_78, %c0_79] : memref<32x128xf32, #tpu.memory_space<vmem>>, vector<32x128xf32>
      %cst_80 = arith.constant dense<0.000000e+00> : vector<1x128xf32>
      %222 = tpu.matmul %220, %221, %cst_80 {dimension_numbers = #tpu.dot_dimension_numbers<[1], [0], [0], [1], [0, 0, 1, 1], [], []>} : vector<1x32xf32>, vector<32x128xf32>, vector<1x128xf32> -> vector<1x128xf32>
      %c0_81 = arith.constant 0 : index
      %c0_82 = arith.constant 0 : index
      %223 = vector.load %arg15[%c0_81, %c0_82] : memref<1x128xf32, #tpu.memory_space<vmem>>, vector<1x128xf32>
      %224 = arith.addf %222, %223 : vector<1x128xf32>
      %c0_83 = arith.constant 0 : index
      %c0_84 = arith.constant 0 : index
      %c0_85 = arith.constant 0 : index
      %225 = vector.load %arg16[%c0_83, %c0_84, %c0_85] : memref<1x1x128xf32, #tpu.memory_space<vmem>>, vector<1x1x128xf32>
      %226 = vector.shape_cast %225 : vector<1x1x128xf32> to vector<1x128xf32>
      %227 = vector.shape_cast %224 : vector<1x128xf32> to vector<1x1x128xf32>
      tpu.vector_store %arg16[%c0_83, %c0_84, %c0_85], %227 {strides = array<i32>} : memref<1x1x128xf32, #tpu.memory_space<vmem>>, vector<1x1x128xf32>,
    } else {
    }
    return
  }
  func.func @transform_0(%arg0: i32, %arg1: i32) -> (i32, i32, i32) {
    %c0_i32 = arith.constant 0 : i32
    %c0_i32_0 = arith.constant 0 : i32
    %c0_i32_1 = arith.constant 0 : i32
    return %arg0, %c0_i32, %c0_i32_0 : i32, i32, i32
  }
  func.func @transform_1(%arg0: i32, %arg1: i32) -> (i32, i32) {
    %c0_i32 = arith.constant 0 : i32
    %c0_i32_0 = arith.constant 0 : i32
    %c0_i32_1 = arith.constant 0 : i32
    return %c0_i32, %c0_i32_0 : i32, i32
  }
  func.func @transform_2(%arg0: i32, %arg1: i32) -> (i32, i32) {
    %c0_i32 = arith.constant 0 : i32
    %c0_i32_0 = arith.constant 0 : i32
    %c0_i32_1 = arith.constant 0 : i32
    return %c0_i32, %c0_i32_0 : i32, i32
  }
  func.func @transform_3(%arg0: i32, %arg1: i32) -> (i32, i32) {
    %c0_i32 = arith.constant 0 : i32
    %c0_i32_0 = arith.constant 0 : i32
    %c0_i32_1 = arith.constant 0 : i32
    return %c0_i32, %c0_i32_0 : i32, i32
  }
  func.func @transform_4(%arg0: i32, %arg1: i32) -> (i32, i32) {
    %c0_i32 = arith.constant 0 : i32
    %c0_i32_0 = arith.constant 0 : i32
    %c0_i32_1 = arith.constant 0 : i32
    return %c0_i32, %c0_i32_0 : i32, i32
  }
  func.func @transform_5(%arg0: i32, %arg1: i32) -> (i32, i32, i32) {
    %c0_i32 = arith.constant 0 : i32
    %c0_i32_0 = arith.constant 0 : i32
    %c0_i32_1 = arith.constant 0 : i32
    return %arg1, %c0_i32, %c0_i32_0 : i32, i32, i32
  }
  func.func @transform_6(%arg0: i32, %arg1: i32) -> (i32, i32, i32) {
    %c0_i32 = arith.constant 0 : i32
    %c0_i32_0 = arith.constant 0 : i32
    %c0_i32_1 = arith.constant 0 : i32
    return %arg1, %c0_i32, %c0_i32_0 : i32, i32, i32
  }
  func.func @transform_7(%arg0: i32, %arg1: i32) -> (i32, i32, i32) {
    %c0_i32 = arith.constant 0 : i32
    %c0_i32_0 = arith.constant 0 : i32
    %c0_i32_1 = arith.constant 0 : i32
    return %arg1, %c0_i32, %c0_i32_0 : i32, i32, i32
  }
  func.func @transform_8(%arg0: i32, %arg1: i32) -> (i32, i32, i32) {
    %c0_i32 = arith.constant 0 : i32
    %c0_i32_0 = arith.constant 0 : i32
    %c0_i32_1 = arith.constant 0 : i32
    return %arg1, %c0_i32, %c0_i32_0 : i32, i32, i32
  }
  func.func @transform_9(%arg0: i32, %arg1: i32) -> (i32, i32, i32) {
    %c0_i32 = arith.constant 0 : i32
    %c0_i32_0 = arith.constant 0 : i32
    %c0_i32_1 = arith.constant 0 : i32
    return %arg1, %c0_i32, %c0_i32_0 : i32, i32, i32
  }
  func.func @transform_10(%arg0: i32, %arg1: i32) -> (i32, i32) {
    %c0_i32 = arith.constant 0 : i32
    %c0_i32_0 = arith.constant 0 : i32
    %c0_i32_1 = arith.constant 0 : i32
    return %c0_i32, %c0_i32_0 : i32, i32
  }
  func.func @transform_11(%arg0: i32, %arg1: i32) -> (i32, i32) {
    %c0_i32 = arith.constant 0 : i32
    %c0_i32_0 = arith.constant 0 : i32
    %c0_i32_1 = arith.constant 0 : i32
    return %c0_i32, %c0_i32_0 : i32, i32
  }
  func.func @transform_12(%arg0: i32, %arg1: i32) -> (i32, i32) {
    %c0_i32 = arith.constant 0 : i32
    %c0_i32_0 = arith.constant 0 : i32
    %c0_i32_1 = arith.constant 0 : i32
    return %c0_i32, %c0_i32_0 : i32, i32
  }
  func.func @transform_13(%arg0: i32, %arg1: i32) -> (i32, i32) {
    %c0_i32 = arith.constant 0 : i32
    %c0_i32_0 = arith.constant 0 : i32
    %c0_i32_1 = arith.constant 0 : i32
    return %c0_i32, %c0_i32_0 : i32, i32
  }
  func.func @transform_14(%arg0: i32, %arg1: i32) -> (i32, i32, i32) {
    %c0_i32 = arith.constant 0 : i32
    %c0_i32_0 = arith.constant 0 : i32
    %c0_i32_1 = arith.constant 0 : i32
    return %arg0, %c0_i32, %c0_i32_0 : i32, i32, i32
  }
}

</mosaic_0001>

<llo_original>
// kernel: vit_forward.1
$region0: #{vit_forward.1}
  #allocation0 [shape = 'u32[]', space=smem, size = 0x4, offset = 0x4, fixed_abs, tag = 'smem constant byte address 0x4 - core index']
  #allocation1 [shape = 'u32[144,128]{1,0:T(1,128)}', space=vmem, size = 0x12000, scoped, tag = 'internal scratch']
  #allocation2 [shape = 'f32[1,24,32]{2,1,0:T(8,128)}', space=vmem, size = 0x3000, scoped, tag = 'scratch operand']
  %s0 = inlined_call_operand.vmem [shape: f32[2,16,64], index: 0, kind: input, shape index: {}]
  %s1 = inlined_call_operand.vmem [shape: f32[64,32], index: 1, kind: input, shape index: {}]
  %s2 = inlined_call_operand.vmem [shape: f32[1,32], index: 2, kind: input, shape index: {}]
  %s3 = inlined_call_operand.vmem [shape: f32[1,32], index: 3, kind: input, shape index: {}]
  %s4 = inlined_call_operand.vmem [shape: f32[24,32], index: 4, kind: input, shape index: {}]
  %s5 = inlined_call_operand.vmem [shape: f32[2,8,128], index: 5, kind: input, shape index: {}]
  %s6 = inlined_call_operand.vmem [shape: f32[2,32,96], index: 6, kind: input, shape index: {}]
  %s7 = inlined_call_operand.vmem [shape: f32[2,32,32], index: 7, kind: input, shape index: {}]
  %s8 = inlined_call_operand.vmem [shape: f32[2,32,64], index: 8, kind: input, shape index: {}]
  %s9 = inlined_call_operand.vmem [shape: f32[2,64,32], index: 9, kind: input, shape index: {}]
  %s10 = inlined_call_operand.vmem [shape: f32[1,32], index: 10, kind: input, shape index: {}]
  %s11 = inlined_call_operand.vmem [shape: f32[1,32], index: 11, kind: input, shape index: {}]
  %s12 = inlined_call_operand.vmem [shape: f32[32,128], index: 12, kind: input, shape index: {}]
  %s13 = inlined_call_operand.vmem [shape: f32[1,128], index: 13, kind: input, shape index: {}]
  %s14 = inlined_call_operand.hbm [shape: f32[2,1,128], index: 14, kind: output, shape index: {}]
  %s15 = sld [smem:[#allocation0]]
  $region97: #{vit_forward.1} parent=0
    _
  %s17 = ssub.s32 1, %s15
  %s18 = scalar_select 0, %s17, %s15
  $region1: #{vit_forward.1} parent=0
    #allocation3 [shape = 'u8[1024]{0}', space=vmem, size = 0x400, scoped, tag = 'output window, operand 0']
    #allocation4 [shape = 's32[2]{0}', space=sflag, size = 0x8, scoped, tag = 'scoped memory for vit_forward.1']
    %19 = vsyncpa [#allocation4], 0
    %s20 = scalar_lea.sflag [#allocation4], 1
    %21 = vsyncpa %s20, 0
    loop: start=0, step=1, limit=6
    $region2: #{vit_forward.1} parent=1 // loop_pre_header
      _
    $region3: #{vit_forward.1} parent=1 // loop_header
      %s23 = sphi 0, %s27
      %p24 = scmp.ge.s32.totalorder %s23, 6
      %s30 = sphi 0, %s42
      %s31 = sphi 0, %s38
      %s32 = sphi 0, %s30
      %s33 = sphi 0, %s31
      %s34 = sphi 0, %s32
      %s35 = sphi 0, %s33
      %s45 = sphi 0, %s47
      %s48 = sphi 0, %s45
      %s49 = sphi 0, %s48
      %s65 = sphi 0, %s49
      %s69 = sphi 0, %s69
      %s71 = sphi 0, %s69
      %s72 = sphi 0, %s71
      %s86 = sphi 0, %s72
      %s90 = sphi 0, %s90
      %s92 = sphi 0, %s90
      %s93 = sphi 0, %s92
      %s107 = sphi 0, %s93
      %s111 = sphi 0, %s111
      %s113 = sphi 0, %s111
      %s114 = sphi 0, %s113
      %s128 = sphi 0, %s114
      %s132 = sphi 0, %s132
      %s134 = sphi 0, %s132
      %s135 = sphi 0, %s134
      %s149 = sphi 0, %s135
      %s155 = sphi 0, %s157
      %s158 = sphi 0, %s155
      %s159 = sphi 0, %s158
      %s175 = sphi 0, %s159
      %s181 = sphi 0, %s183
      %s184 = sphi 0, %s181
      %s185 = sphi 0, %s184
      %s201 = sphi 0, %s185
      %s207 = sphi 0, %s209
      %s210 = sphi 0, %s207
      %s211 = sphi 0, %s210
      %s227 = sphi 0, %s211
      %s233 = sphi 0, %s235
      %s236 = sphi 0, %s233
      %s237 = sphi 0, %s236
      %s253 = sphi 0, %s237
      %s259 = sphi 0, %s261
      %s262 = sphi 0, %s259
      %s263 = sphi 0, %s262
      %s279 = sphi 0, %s263
      %s283 = sphi 0, %s283
      %s285 = sphi 0, %s283
      %s286 = sphi 0, %s285
      %s300 = sphi 0, %s286
      %s304 = sphi 0, %s304
      %s306 = sphi 0, %s304
      %s307 = sphi 0, %s306
      %s321 = sphi 0, %s307
      %s325 = sphi 0, %s325
      %s327 = sphi 0, %s325
      %s328 = sphi 0, %s327
      %s342 = sphi 0, %s328
      %s346 = sphi 0, %s346
      %s348 = sphi 0, %s346
      %s349 = sphi 0, %s348
      %s363 = sphi 0, %s349
      %s369 = sphi 0, %s371
      %s372 = sphi 0, %s369
      %s373 = sphi 0, %s372
      %s389 = sphi 0, %s373
    $region4: #{vit_forward.1} parent=1 // loop_header_branch
      %26 = sbr.rel (%p24) target = $region8
    $region5: #{vit_forward.1} parent=1 // loop_body
      %s28 = ssub.s32 %s23, 1
      %s29 = ssub.s32 %s23, 2
      %s36 = sadd.s32 1, %s31
      %p37 = scmp.ge.s32.totalorder %s36, 2
      %s38 = scalar_select %p37, 0, %s36
      %s39 = sadd.s32 1, %s30
      %s40 = scalar_select %p37, %s39, %s30
      %p41 = scmp.ge.s32.totalorder %s40, 2
      %s42 = scalar_select %p41, 0, %s40
      %s43 = ssub.s32 %s30, %s42
      %p44 = scmp.eq.s32.totalorder %s43, 0
      %s46 = sadd.s32 %s45, 1
      %s47 = scalar_select %p44, %s45, %s46
      %p50 = pneg %p44
      %p51 = scmp.eq.s32.totalorder %s23, 3
      %p52 = por %p50, %p51
      %p53 = scmp.ne.s32.totalorder %s45, %s48
      %p54 = scmp.eq.s32.totalorder %s23, 0
      %p55 = por %p53, %p54
      %p56 = scmp.ne.s32.totalorder %s45, %s48
      %p57 = scmp.eq.s32.totalorder %s28, 3
      %p58 = por %p56, %p57
      %p59 = scmp.ne.s32.totalorder %s48, %s49
      %p60 = scmp.eq.s32.totalorder %s28, 0
      %p61 = por %p59, %p60
      %p62 = scmp.ne.s32.totalorder %s48, %s49
      %p63 = scmp.eq.s32.totalorder %s29, 3
      %p64 = por %p62, %p63
      %p66 = scmp.ne.s32.totalorder %s49, %s65
      %p67 = scmp.eq.s32.totalorder %s29, 0
      %p68 = por %p66, %p67
      %s70 = sadd.s32 %s69, 1
      %p73 = scmp.eq.s32.totalorder %s23, 3
      %p74 = scmp.ne.s32.totalorder %s69, %s71
      %p75 = scmp.eq.s32.totalorder %s23, 0
      %p76 = por %p74, %p75
      %p77 = scmp.ne.s32.totalorder %s69, %s71
      %p78 = scmp.eq.s32.totalorder %s28, 3
      %p79 = por %p77, %p78
      %p80 = scmp.ne.s32.totalorder %s71, %s72
      %p81 = scmp.eq.s32.totalorder %s28, 0
      %p82 = por %p80, %p81
      %p83 = scmp.ne.s32.totalorder %s71, %s72
      %p84 = scmp.eq.s32.totalorder %s29, 3
      %p85 = por %p83, %p84
      %p87 = scmp.ne.s32.totalorder %s72, %s86
      %p88 = scmp.eq.s32.totalorder %s29, 0
      %p89 = por %p87, %p88
      %s91 = sadd.s32 %s90, 1
      %p94 = scmp.eq.s32.totalorder %s23, 3
      %p95 = scmp.ne.s32.totalorder %s90, %s92
      %p96 = scmp.eq.s32.totalorder %s23, 0
      %p97 = por %p95, %p96
      %p98 = scmp.ne.s32.totalorder %s90, %s92
      %p99 = scmp.eq.s32.totalorder %s28, 3
      %p100 = por %p98, %p99
      %p101 = scmp.ne.s32.totalorder %s92, %s93
      %p102 = scmp.eq.s32.totalorder %s28, 0
      %p103 = por %p101, %p102
      %p104 = scmp.ne.s32.totalorder %s92, %s93
      %p105 = scmp.eq.s32.totalorder %s29, 3
      %p106 = por %p104, %p105
      %p108 = scmp.ne.s32.totalorder %s93, %s107
      %p109 = scmp.eq.s32.totalorder %s29, 0
      %p110 = por %p108, %p109
      %s112 = sadd.s32 %s111, 1
      %p115 = scmp.eq.s32.totalorder %s23, 3
      %p116 = scmp.ne.s32.totalorder %s111, %s113
      %p117 = scmp.eq.s32.totalorder %s23, 0
      %p118 = por %p116, %p117
      %p119 = scmp.ne.s32.totalorder %s111, %s113
      %p120 = scmp.eq.s32.totalorder %s28, 3
      %p121 = por %p119, %p120
      %p122 = scmp.ne.s32.totalorder %s113, %s114
      %p123 = scmp.eq.s32.totalorder %s28, 0
      %p124 = por %p122, %p123
      %p125 = scmp.ne.s32.totalorder %s113, %s114
      %p126 = scmp.eq.s32.totalorder %s29, 3
      %p127 = por %p125, %p126
      %p129 = scmp.ne.s32.totalorder %s114, %s128
      %p130 = scmp.eq.s32.totalorder %s29, 0
      %p131 = por %p129, %p130
      %s133 = sadd.s32 %s132, 1
      %p136 = scmp.eq.s32.totalorder %s23, 3
      %p137 = scmp.ne.s32.totalorder %s132, %s134
      %p138 = scmp.eq.s32.totalorder %s23, 0
      %p139 = por %p137, %p138
      %p140 = scmp.ne.s32.totalorder %s132, %s134
      %p141 = scmp.eq.s32.totalorder %s28, 3
      %p142 = por %p140, %p141
      %p143 = scmp.ne.s32.totalorder %s134, %s135
      %p144 = scmp.eq.s32.totalorder %s28, 0
      %p145 = por %p143, %p144
      %p146 = scmp.ne.s32.totalorder %s134, %s135
      %p147 = scmp.eq.s32.totalorder %s29, 3
      %p148 = por %p146, %p147
      %p150 = scmp.ne.s32.totalorder %s135, %s149
      %p151 = scmp.eq.s32.totalorder %s29, 0
      %p152 = por %p150, %p151
      %s153 = ssub.s32 %s31, %s38
      %p154 = scmp.eq.s32.totalorder %s153, 0
      %s156 = sadd.s32 %s155, 1
      %s157 = scalar_select %p154, %s155, %s156
      %p160 = pneg %p154
      %p161 = scmp.eq.s32.totalorder %s23, 3
      %p162 = por %p160, %p161
      %p163 = scmp.ne.s32.totalorder %s155, %s158
      %p164 = scmp.eq.s32.totalorder %s23, 0
      %p165 = por %p163, %p164
      %p166 = scmp.ne.s32.totalorder %s155, %s158
      %p167 = scmp.eq.s32.totalorder %s28, 3
      %p168 = por %p166, %p167
      %p169 = scmp.ne.s32.totalorder %s158, %s159
      %p170 = scmp.eq.s32.totalorder %s28, 0
      %p171 = por %p169, %p170
      %p172 = scmp.ne.s32.totalorder %s158, %s159
      %p173 = scmp.eq.s32.totalorder %s29, 3
      %p174 = por %p172, %p173
      %p176 = scmp.ne.s32.totalorder %s159, %s175
      %p177 = scmp.eq.s32.totalorder %s29, 0
      %p178 = por %p176, %p177
      %s179 = ssub.s32 %s31, %s38
      %p180 = scmp.eq.s32.totalorder %s179, 0
      %s182 = sadd.s32 %s181, 1
      %s183 = scalar_select %p180, %s181, %s182
      %p186 = pneg %p180
      %p187 = scmp.eq.s32.totalorder %s23, 3
      %p188 = por %p186, %p187
      %p189 = scmp.ne.s32.totalorder %s181, %s184
      %p190 = scmp.eq.s32.totalorder %s23, 0
      %p191 = por %p189, %p190
      %p192 = scmp.ne.s32.totalorder %s181, %s184
      %p193 = scmp.eq.s32.totalorder %s28, 3
      %p194 = por %p192, %p193
      %p195 = scmp.ne.s32.totalorder %s184, %s185
      %p196 = scmp.eq.s32.totalorder %s28, 0
      %p197 = por %p195, %p196
      %p198 = scmp.ne.s32.totalorder %s184, %s185
      %p199 = scmp.eq.s32.totalorder %s29, 3
      %p200 = por %p198, %p199
      %p202 = scmp.ne.s32.totalorder %s185, %s201
      %p203 = scmp.eq.s32.totalorder %s29, 0
      %p204 = por %p202, %p203
      %s205 = ssub.s32 %s31, %s38
      %p206 = scmp.eq.s32.totalorder %s205, 0
      %s208 = sadd.s32 %s207, 1
      %s209 = scalar_select %p206, %s207, %s208
      %p212 = pneg %p206
      %p213 = scmp.eq.s32.totalorder %s23, 3
      %p214 = por %p212, %p213
      %p215 = scmp.ne.s32.totalorder %s207, %s210
      %p216 = scmp.eq.s32.totalorder %s23, 0
      %p217 = por %p215, %p216
      %p218 = scmp.ne.s32.totalorder %s207, %s210
      %p219 = scmp.eq.s32.totalorder %s28, 3
      %p220 = por %p218, %p219
      %p221 = scmp.ne.s32.totalorder %s210, %s211
      %p222 = scmp.eq.s32.totalorder %s28, 0
      %p223 = por %p221, %p222
      %p224 = scmp.ne.s32.totalorder %s210, %s211
      %p225 = scmp.eq.s32.totalorder %s29, 3
      %p226 = por %p224, %p225
      %p228 = scmp.ne.s32.totalorder %s211, %s227
      %p229 = scmp.eq.s32.totalorder %s29, 0
      %p230 = por %p228, %p229
      %s231 = ssub.s32 %s31, %s38
      %p232 = scmp.eq.s32.totalorder %s231, 0
      %s234 = sadd.s32 %s233, 1
      %s235 = scalar_select %p232, %s233, %s234
      %p238 = pneg %p232
      %p239 = scmp.eq.s32.totalorder %s23, 3
      %p240 = por %p238, %p239
      %p241 = scmp.ne.s32.totalorder %s233, %s236
      %p242 = scmp.eq.s32.totalorder %s23, 0
      %p243 = por %p241, %p242
      %p244 = scmp.ne.s32.totalorder %s233, %s236
      %p245 = scmp.eq.s32.totalorder %s28, 3
      %p246 = por %p244, %p245
      %p247 = scmp.ne.s32.totalorder %s236, %s237
      %p248 = scmp.eq.s32.totalorder %s28, 0
      %p249 = por %p247, %p248
      %p250 = scmp.ne.s32.totalorder %s236, %s237
      %p251 = scmp.eq.s32.totalorder %s29, 3
      %p252 = por %p250, %p251
      %p254 = scmp.ne.s32.totalorder %s237, %s253
      %p255 = scmp.eq.s32.totalorder %s29, 0
      %p256 = por %p254, %p255
      %s257 = ssub.s32 %s31, %s38
      %p258 = scmp.eq.s32.totalorder %s257, 0
      %s260 = sadd.s32 %s259, 1
      %s261 = scalar_select %p258, %s259, %s260
      %p264 = pneg %p258
      %p265 = scmp.eq.s32.totalorder %s23, 3
      %p266 = por %p264, %p265
      %p267 = scmp.ne.s32.totalorder %s259, %s262
      %p268 = scmp.eq.s32.totalorder %s23, 0
      %p269 = por %p267, %p268
      %p270 = scmp.ne.s32.totalorder %s259, %s262
      %p271 = scmp.eq.s32.totalorder %s28, 3
      %p272 = por %p270, %p271
      %p273 = scmp.ne.s32.totalorder %s262, %s263
      %p274 = scmp.eq.s32.totalorder %s28, 0
      %p275 = por %p273, %p274
      %p276 = scmp.ne.s32.totalorder %s262, %s263
      %p277 = scmp.eq.s32.totalorder %s29, 3
      %p278 = por %p276, %p277
      %p280 = scmp.ne.s32.totalorder %s263, %s279
      %p281 = scmp.eq.s32.totalorder %s29, 0
      %p282 = por %p280, %p281
      %s284 = sadd.s32 %s283, 1
      %p287 = scmp.eq.s32.totalorder %s23, 3
      %p288 = scmp.ne.s32.totalorder %s283, %s285
      %p289 = scmp.eq.s32.totalorder %s23, 0
      %p290 = por %p288, %p289
      %p291 = scmp.ne.s32.totalorder %s283, %s285
      %p292 = scmp.eq.s32.totalorder %s28, 3
      %p293 = por %p291, %p292
      %p294 = scmp.ne.s32.totalorder %s285, %s286
      %p295 = scmp.eq.s32.totalorder %s28, 0
      %p296 = por %p294, %p295
      %p297 = scmp.ne.s32.totalorder %s285, %s286
      %p298 = scmp.eq.s32.totalorder %s29, 3
      %p299 = por %p297, %p298
      %p301 = scmp.ne.s32.totalorder %s286, %s300
      %p302 = scmp.eq.s32.totalorder %s29, 0
      %p303 = por %p301, %p302
      %s305 = sadd.s32 %s304, 1
      %p308 = scmp.eq.s32.totalorder %s23, 3
      %p309 = scmp.ne.s32.totalorder %s304, %s306
      %p310 = scmp.eq.s32.totalorder %s23, 0
      %p311 = por %p309, %p310
      %p312 = scmp.ne.s32.totalorder %s304, %s306
      %p313 = scmp.eq.s32.totalorder %s28, 3
      %p314 = por %p312, %p313
      %p315 = scmp.ne.s32.totalorder %s306, %s307
      %p316 = scmp.eq.s32.totalorder %s28, 0
      %p317 = por %p315, %p316
      %p318 = scmp.ne.s32.totalorder %s306, %s307
      %p319 = scmp.eq.s32.totalorder %s29, 3
      %p320 = por %p318, %p319
      %p322 = scmp.ne.s32.totalorder %s307, %s321
      %p323 = scmp.eq.s32.totalorder %s29, 0
      %p324 = por %p322, %p323
      %s326 = sadd.s32 %s325, 1
      %p329 = scmp.eq.s32.totalorder %s23, 3
      %p330 = scmp.ne.s32.totalorder %s325, %s327
      %p331 = scmp.eq.s32.totalorder %s23, 0
      %p332 = por %p330, %p331
      %p333 = scmp.ne.s32.totalorder %s325, %s327
      %p334 = scmp.eq.s32.totalorder %s28, 3
      %p335 = por %p333, %p334
      %p336 = scmp.ne.s32.totalorder %s327, %s328
      %p337 = scmp.eq.s32.totalorder %s28, 0
      %p338 = por %p336, %p337
      %p339 = scmp.ne.s32.totalorder %s327, %s328
      %p340 = scmp.eq.s32.totalorder %s29, 3
      %p341 = por %p339, %p340
      %p343 = scmp.ne.s32.totalorder %s328, %s342
      %p344 = scmp.eq.s32.totalorder %s29, 0
      %p345 = por %p343, %p344
      %s347 = sadd.s32 %s346, 1
      %p350 = scmp.eq.s32.totalorder %s23, 3
      %p351 = scmp.ne.s32.totalorder %s346, %s348
      %p352 = scmp.eq.s32.totalorder %s23, 0
      %p353 = por %p351, %p352
      %p354 = scmp.ne.s32.totalorder %s346, %s348
      %p355 = scmp.eq.s32.totalorder %s28, 3
      %p356 = por %p354, %p355
      %p357 = scmp.ne.s32.totalorder %s348, %s349
      %p358 = scmp.eq.s32.totalorder %s28, 0
      %p359 = por %p357, %p358
      %p360 = scmp.ne.s32.totalorder %s348, %s349
      %p361 = scmp.eq.s32.totalorder %s29, 3
      %p362 = por %p360, %p361
      %p364 = scmp.ne.s32.totalorder %s349, %s363
      %p365 = scmp.eq.s32.totalorder %s29, 0
      %p366 = por %p364, %p365
      %s367 = ssub.s32 %s30, %s42
      %p368 = scmp.eq.s32.totalorder %s367, 0
      %s370 = sadd.s32 %s369, 1
      %s371 = scalar_select %p368, %s369, %s370
      %p374 = pneg %p368
      %p375 = scmp.eq.s32.totalorder %s23, 3
      %p376 = por %p374, %p375
      %p377 = scmp.ne.s32.totalorder %s369, %s372
      %p378 = scmp.eq.s32.totalorder %s23, 0
      %p379 = por %p377, %p378
      %p380 = scmp.ne.s32.totalorder %s369, %s372
      %p381 = scmp.eq.s32.totalorder %s28, 3
      %p382 = por %p380, %p381
      %p383 = scmp.ne.s32.totalorder %s372, %s373
      %p384 = scmp.eq.s32.totalorder %s28, 0
      %p385 = por %p383, %p384
      %p386 = scmp.ne.s32.totalorder %s372, %s373
      %p387 = scmp.eq.s32.totalorder %s29, 3
      %p388 = por %p386, %p387
      %p390 = scmp.ne.s32.totalorder %s373, %s389
      %p391 = scmp.eq.s32.totalorder %s29, 0
      %p392 = por %p390, %p391
      %p393 = scmp.le.s32.totalorder 1, %s23
      %p394 = scmp.lt.s32.totalorder %s23, 5
      %p395 = pnand %p393, %p394
      %p396 = pneg %p395
      // Predicated region
      $region9: #{vit_forward.1} parent=5 // pred_check
        _
      $region10: #{vit_forward.1} parent=5 // pred_check_branch
        %398 = sbr.rel (%p395) target = $region12
      $region11: #{vit_forward.1} parent=5 // pred_region
        %s399 = ssub.s32 %s23, 1
        // Predicated region
        $region13: #{vit_forward.1} parent=11 // pred_check
          %p400 = pneg %p82
        $region14: #{vit_forward.1} parent=11 // pred_check_branch
          %402 = sbr.rel (%p400) target = $region16
        $region15: #{vit_forward.1} parent=11 // pred_region
          _
        $region16: #{vit_forward.1} parent=11 // pred_fallthru
          _
        // Predicated region
        $region17: #{vit_forward.1} parent=11 // pred_check
          %p403 = pneg %p103
        $region18: #{vit_forward.1} parent=11 // pred_check_branch
          %405 = sbr.rel (%p403) target = $region20
        $region19: #{vit_forward.1} parent=11 // pred_region
          _
        $region20: #{vit_forward.1} parent=11 // pred_fallthru
          _
        // Predicated region
        $region21: #{vit_forward.1} parent=11 // pred_check
          %p406 = pneg %p124
        $region22: #{vit_forward.1} parent=11 // pred_check_branch
          %408 = sbr.rel (%p406) target = $region24
        $region23: #{vit_forward.1} parent=11 // pred_region
          _
        $region24: #{vit_forward.1} parent=11 // pred_fallthru
          _
        // Predicated region
        $region25: #{vit_forward.1} parent=11 // pred_check
          %p409 = pneg %p145
        $region26: #{vit_forward.1} parent=11 // pred_check_branch
          %411 = sbr.rel (%p409) target = $region28
        $region27: #{vit_forward.1} parent=11 // pred_region
          _
        $region28: #{vit_forward.1} parent=11 // pred_fallthru
          _
        // Predicated region
        $region29: #{vit_forward.1} parent=11 // pred_check
          %p412 = pneg %p296
        $region30: #{vit_forward.1} parent=11 // pred_check_branch
          %414 = sbr.rel (%p412) target = $region32
        $region31: #{vit_forward.1} parent=11 // pred_region
          _
        $region32: #{vit_forward.1} parent=11 // pred_fallthru
          _
        // Predicated region
        $region33: #{vit_forward.1} parent=11 // pred_check
          %p415 = pneg %p317
        $region34: #{vit_forward.1} parent=11 // pred_check_branch
          %417 = sbr.rel (%p415) target = $region36
        $region35: #{vit_forward.1} parent=11 // pred_region
          _
        $region36: #{vit_forward.1} parent=11 // pred_fallthru
          _
        // Predicated region
        $region37: #{vit_forward.1} parent=11 // pred_check
          %p418 = pneg %p338
        $region38: #{vit_forward.1} parent=11 // pred_check_branch
          %420 = sbr.rel (%p418) target = $region40
        $region39: #{vit_forward.1} parent=11 // pred_region
          _
        $region40: #{vit_forward.1} parent=11 // pred_fallthru
          _
        // Predicated region
        $region41: #{vit_forward.1} parent=11 // pred_check
          %p421 = pneg %p359
        $region42: #{vit_forward.1} parent=11 // pred_check_branch
          %423 = sbr.rel (%p421) target = $region44
        $region43: #{vit_forward.1} parent=11 // pred_region
          _
        $region44: #{vit_forward.1} parent=11 // pred_fallthru
          _
      $region12: #{vit_forward.1} parent=5 // pred_fallthru
        _
      %p424 = scmp.lt.s32.totalorder %s23, 4
      // Predicated region
      $region45: #{vit_forward.1} parent=5 // pred_check
        %p425 = pneg %p424
      $region46: #{vit_forward.1} parent=5 // pred_check_branch
        %427 = sbr.rel (%p425) target = $region48
      $region47: #{vit_forward.1} parent=5 // pred_region
        // Predicated region
        $region49: #{vit_forward.1} parent=47 // pred_check
          %p428 = pneg %p55
        $region50: #{vit_forward.1} parent=47 // pred_check_branch
          %430 = sbr.rel (%p428) target = $region52
        $region51: #{vit_forward.1} parent=47 // pred_region
          %p431 = scmp.lt.s32.totalorder %s30, 1
          %s432 = scalar_select %p431, %s30, 1
          %s433 = smul.addr %s432, 2
          %s434 = smul.addr %s433, 8
          %s435 = scalar_lea.vmem %s0, %s434
        $region52: #{vit_forward.1} parent=47 // pred_fallthru
          _
        // Predicated region
        $region53: #{vit_forward.1} parent=47 // pred_check
          %p436 = pneg %p165
        $region54: #{vit_forward.1} parent=47 // pred_check_branch
          %438 = sbr.rel (%p436) target = $region56
        $region55: #{vit_forward.1} parent=47 // pred_region
          %p439 = scmp.lt.s32.totalorder %s31, 1
          %s440 = scalar_select %p439, %s31, 1
          %s441 = smul.addr %s440, 8
          %s442 = scalar_lea.vmem %s5, %s441
        $region56: #{vit_forward.1} parent=47 // pred_fallthru
          _
        // Predicated region
        $region57: #{vit_forward.1} parent=47 // pred_check
          %p443 = pneg %p191
        $region58: #{vit_forward.1} parent=47 // pred_check_branch
          %445 = sbr.rel (%p443) target = $region60
        $region59: #{vit_forward.1} parent=47 // pred_region
          %p446 = scmp.lt.s32.totalorder %s31, 1
          %s447 = scalar_select %p446, %s31, 1
          %s448 = smul.addr %s447, 4
          %s449 = smul.addr %s448, 8
          %s450 = scalar_lea.vmem %s6, %s449
        $region60: #{vit_forward.1} parent=47 // pred_fallthru
          _
        // Predicated region
        $region61: #{vit_forward.1} parent=47 // pred_check
          %p451 = pneg %p217
        $region62: #{vit_forward.1} parent=47 // pred_check_branch
          %453 = sbr.rel (%p451) target = $region64
        $region63: #{vit_forward.1} parent=47 // pred_region
          %p454 = scmp.lt.s32.totalorder %s31, 1
          %s455 = scalar_select %p454, %s31, 1
          %s456 = smul.addr %s455, 4
          %s457 = smul.addr %s456, 8
          %s458 = scalar_lea.vmem %s7, %s457
        $region64: #{vit_forward.1} parent=47 // pred_fallthru
          _
        // Predicated region
        $region65: #{vit_forward.1} parent=47 // pred_check
          %p459 = pneg %p243
        $region66: #{vit_forward.1} parent=47 // pred_check_branch
          %461 = sbr.rel (%p459) target = $region68
        $region67: #{vit_forward.1} parent=47 // pred_region
          %p462 = scmp.lt.s32.totalorder %s31, 1
          %s463 = scalar_select %p462, %s31, 1
          %s464 = smul.addr %s463, 4
          %s465 = smul.addr %s464, 8
          %s466 = scalar_lea.vmem %s8, %s465
        $region68: #{vit_forward.1} parent=47 // pred_fallthru
          _
        // Predicated region
        $region69: #{vit_forward.1} parent=47 // pred_check
          %p467 = pneg %p269
        $region70: #{vit_forward.1} parent=47 // pred_check_branch
          %469 = sbr.rel (%p467) target = $region72
        $region71: #{vit_forward.1} parent=47 // pred_region
          %p470 = scmp.lt.s32.totalorder %s31, 1
          %s471 = scalar_select %p470, %s31, 1
          %s472 = smul.addr %s471, 8
          %s473 = smul.addr %s472, 8
          %s474 = scalar_lea.vmem %s9, %s473
        $region72: #{vit_forward.1} parent=47 // pred_fallthru
          _
      $region48: #{vit_forward.1} parent=5 // pred_fallthru
        _
      %p475 = scmp.le.s32.totalorder 1, %s23
      %p476 = scmp.lt.s32.totalorder %s23, 5
      %p477 = pnand %p475, %p476
      %p478 = pneg %p477
      // Predicated region
      $region73: #{vit_forward.1} parent=5 // pred_check
        _
      $region74: #{vit_forward.1} parent=5 // pred_check_branch
        %480 = sbr.rel (%p477) target = $region76
      $region75: #{vit_forward.1} parent=5 // pred_region
        %s481 = ssub.s32 %s23, 1
        %p482 = scmp.lt.s32.totalorder %s32, 1
        %s483 = scalar_select %p482, %s32, 1
        %s484 = smul.addr %s483, 2
        %s485 = smul.addr %s484, 8
        %s486 = scalar_lea.vmem %s0, %s485
        %p487 = pneg %p61
        %p488 = pneg %p58
        %p489 = pneg %p82
        %p490 = pneg %p79
        %p491 = pneg %p103
        %p492 = pneg %p100
        %p493 = pneg %p124
        %p494 = pneg %p121
        %p495 = pneg %p145
        %p496 = pneg %p142
        %p497 = scmp.lt.s32.totalorder %s33, 1
        %s498 = scalar_select %p497, %s33, 1
        %s499 = smul.addr %s498, 8
        %s500 = scalar_lea.vmem %s5, %s499
        %p501 = pneg %p171
        %p502 = pneg %p168
        %p503 = scmp.lt.s32.totalorder %s33, 1
        %s504 = scalar_select %p503, %s33, 1
        %s505 = smul.addr %s504, 4
        %s506 = smul.addr %s505, 8
        %s507 = scalar_lea.vmem %s6, %s506
        %p508 = pneg %p197
        %p509 = pneg %p194
        %p510 = scmp.lt.s32.totalorder %s33, 1
        %s511 = scalar_select %p510, %s33, 1
        %s512 = smul.addr %s511, 4
        %s513 = smul.addr %s512, 8
        %s514 = scalar_lea.vmem %s7, %s513
        %p515 = pneg %p223
        %p516 = pneg %p220
        %p517 = scmp.lt.s32.totalorder %s33, 1
        %s518 = scalar_select %p517, %s33, 1
        %s519 = smul.addr %s518, 4
        %s520 = smul.addr %s519, 8
        %s521 = scalar_lea.vmem %s8, %s520
        %p522 = pneg %p249
        %p523 = pneg %p246
        %p524 = scmp.lt.s32.totalorder %s33, 1
        %s525 = scalar_select %p524, %s33, 1
        %s526 = smul.addr %s525, 8
        %s527 = smul.addr %s526, 8
        %s528 = scalar_lea.vmem %s9, %s527
        %p529 = pneg %p275
        %p530 = pneg %p272
        %p531 = pneg %p296
        %p532 = pneg %p293
        %p533 = pneg %p317
        %p534 = pneg %p314
        %p535 = pneg %p338
        %p536 = pneg %p335
        %p537 = pneg %p359
        %p538 = pneg %p356
        %p539 = pneg %p385
        %p540 = pneg %p382
        %s541 = sand.u32 %s372, 1
        %s542 = scalar_lea.sflag [#allocation4], %s541
        %s543 = sand.u32 %s372, 1
        %s544 = scalar_lea.vmem [#allocation3], %s543
        %p545 = scmp.lt.s32.totalorder %s32, 1
        %s546 = scalar_select %p545, %s32, 1
        %s547 = smul.addr %s546, 2
        %s548 = smul.addr %s547, 8
        %s549 = scalar_lea.vmem %s0, %s548
        %p550 = scmp.lt.s32.totalorder %s33, 1
        %s551 = scalar_select %p550, %s33, 1
        %s552 = smul.addr %s551, 8
        %s553 = scalar_lea.vmem %s5, %s552
        %p554 = scmp.lt.s32.totalorder %s33, 1
        %s555 = scalar_select %p554, %s33, 1
        %s556 = smul.addr %s555, 4
        %s557 = smul.addr %s556, 8
        %s558 = scalar_lea.vmem %s6, %s557
        %p559 = scmp.lt.s32.totalorder %s33, 1
        %s560 = scalar_select %p559, %s33, 1
        %s561 = smul.addr %s560, 4
        %s562 = smul.addr %s561, 8
        %s563 = scalar_lea.vmem %s7, %s562
        %p564 = scmp.lt.s32.totalorder %s33, 1
        %s565 = scalar_select %p564, %s33, 1
        %s566 = smul.addr %s565, 4
        %s567 = smul.addr %s566, 8
        %s568 = scalar_lea.vmem %s8, %s567
        %p569 = scmp.lt.s32.totalorder %s33, 1
        %s570 = scalar_select %p569, %s33, 1
        %s571 = smul.addr %s570, 8
        %s572 = smul.addr %s571, 8
        %s573 = scalar_lea.vmem %s9, %s572
        %p574 = scmp.eq.s32.totalorder %s33, 0
        // Predicated region
        $region77: #{vit_forward.1} parent=75 // pred_check
          %p575 = pneg %p574
        $region78: #{vit_forward.1} parent=75 // pred_check_branch
          %577 = sbr.rel (%p575) target = $region80
        $region79: #{vit_forward.1} parent=75 // pred_region
          %v578 = vld [vmem:[%s549] sm:$0xff]
          %v579 = vld [vmem:[%s549 + $0x8] sm:$0xff]
          %v580 = vld [vmem:[%s1] sm:$0xff]
          %v581 = vld [vmem:[%s1 + $0x8] sm:$0xff]
          %v582 = vld [vmem:[%s1 + $0x10] sm:$0xff]
          %v583 = vld [vmem:[%s1 + $0x18] sm:$0xff]
          %v584 = vld [vmem:[%s1 + $0x20] sm:$0xff]
          %v585 = vld [vmem:[%s1 + $0x28] sm:$0xff]
          %v586 = vld [vmem:[%s1 + $0x30] sm:$0xff]
          %v587 = vld [vmem:[%s1 + $0x38] sm:$0xff]
          %v588 = vld [vmem:[%s2] sm:$0x1]
          %v590 = vlaneseq
          %v591 = vshrl.u32 %v590, 7
          %v592 = vsub.s32 0, %v591
          %v593 = vrot.slane %v588, %v592
          %vm595 = vcmask 523264
          %v597 = vsel %vm595, %v578, 0
          %v600 = vsel %vm595, %v579, 0
          %602 = vmatprep.subr.mxu0 0.0
          %603 = vmatpush1.msra.mxu0 %v580
          %604 = vmatprep.subr.mxu0 0.0
          %605 = vmatpush1.msra.mxu0 %v581
          %606 = vmatprep.subr.mxu0 0.0
          %607 = vmatpush1.msra.mxu0 %v582
          %608 = vmatprep.subr.mxu0 0.0
          %609 = vmatpush1.msra.mxu0 %v583
          %610 = vmatprep.subr.mxu0 0.0
          %611 = vmatpush1.msra.mxu0 %v584
          %612 = vmatprep.subr.mxu0 0.0
          %613 = vmatpush1.msra.mxu0 %v585
          %614 = vmatprep.subr.mxu0 0.0
          %615 = vmatpush1.msra.mxu0 %v586
          %616 = vmatprep.subr.mxu0 0.0
          %617 = vmatpush1.msra.mxu0 %v587
          %618 = vmatprep.subr.mxu0 0.0
          %619 = vmatpush1.msra.mxu0 0.0
          %620 = vmatprep.subr.mxu0 0.0
          %621 = vmatpush1.msra.mxu0 0.0
          %622 = vmatprep.subr.mxu0 0.0
          %623 = vmatpush1.msra.mxu0 0.0
          %624 = vmatprep.subr.mxu0 0.0
          %625 = vmatpush1.msra.mxu0 0.0
          %626 = vmatprep.subr.mxu0 0.0
          %627 = vmatpush1.msra.mxu0 0.0
          %628 = vmatprep.subr.mxu0 0.0
          %629 = vmatpush1.msra.mxu0 0.0
          %630 = vmatprep.subr.mxu0 0.0
          %631 = vmatpush1.msra.mxu0 0.0
          %632 = vmatprep.subr.mxu0 0.0
          %633 = vmatpush1.msra.mxu0 0.0
          %634 = vmatprep.subr.mxu0 0.0
          %635 = vmatpush1.msra.mxu0 0.0
          %636 = vmatprep.subr.mxu0 0.0
          %637 = vmatpush1.msra.mxu0 0.0
          %638 = vmatprep.subr.mxu0 0.0
          %639 = vmatpush1.msra.mxu0 0.0
          %640 = vmatprep.subr.mxu0 0.0
          %641 = vmatpush1.msra.mxu0 0.0
          %642 = vmatprep.subr.mxu0 0.0
          %643 = vmatpush1.msra.mxu0 0.0
          %644 = vmatprep.subr.mxu0 0.0
          %645 = vmatpush1.msra.mxu0 0.0
          %646 = vmatprep.subr.mxu0 0.0
          %647 = vmatpush1.msra.mxu0 0.0
          %648 = vmatprep.subr.mxu0 0.0
          %649 = vmatpush1.msra.mxu0 0.0
          %650 = vmatprep.subr.mxu0 0.0
          %651 = vmatpush1.msra.mxu0 0.0
          %652 = vmatprep.subr.mxu0 0.0
          %653 = vmatpush1.msra.mxu0 0.0
          %654 = vmatprep.subr.mxu0 0.0
          %655 = vmatpush1.msra.mxu0 0.0
          %656 = vmatprep.subr.mxu0 0.0
          %657 = vmatpush1.msra.mxu0 0.0
          %658 = vmatprep.subr.mxu0 0.0
          %659 = vmatpush1.msra.mxu0 0.0
          %660 = vmatprep.subr.mxu0 0.0
          %661 = vmatpush1.msra.mxu0 0.0
          %662 = vmatprep.subr.mxu0 0.0
          %663 = vmatpush1.msra.mxu0 0.0
          %664 = vmatprep.subr.mxu0 0.0
          %665 = vmatpush1.msra.mxu0 0.0
          %666 = vmatprep.mubr.f32.mxu0 0.0
          %667 = vmatmul.mubr.f32.gmra.mrb[0].mxu0 %v597
          %v668 = vpop.f32.mrb[0].mxu0
          %v669 = vadd.f32 %v593, %v668
          %v670 = vpop.f32.mrb[0].mxu0
          %671 = vmatprep.mubr.f32.mxu0 0.0
          %672 = vmatmul.mubr.f32.gmra.mrb[0].mxu0 %v600
          %v673 = vpop.f32.mrb[0].mxu0
          %v674 = vadd.f32 %v593, %v673
          %v675 = vpop.f32.mrb[0].mxu0
          %676 = vdwg.mxu0
          %v677 = vld [vmem:[%s3] sm:$0x1]
          %v678 = vld [vmem:[%s4] sm:$0x1]
          %v679 = vadd.f32 %v677, %v678
          %vm680 = vcmask 253952
          %681 = vst.msk [vmem:[#allocation2] sm:$0x1] %vm680, %v679
          %v682 = vld [vmem:[%s4 + $0x1] sm:$0xff]
          %v683 = vld [vmem:[%s4 + $0x9] sm:$0xff]
          %v684 = vadd.f32 %v669, %v682
          %v685 = vadd.f32 %v674, %v683
          %vm686 = vcmask 261120
          %687 = vst.msk [vmem:[#allocation2 + $0x1] sm:$0xff] %vm686, %v684
          %688 = vst.msk [vmem:[#allocation2 + $0x9] sm:$0xff] %vm686, %v685
          %vm689 = vcmask 260096
          %690 = vst.msk [vmem:[#allocation2 + $0x11] sm:$0x7f] %vm689, 0.0
        $region80: #{vit_forward.1} parent=75 // pred_fallthru
          _
        %v691 = vld [vmem:[%s553] sm:$0xff]
        %v692 = vld [vmem:[#allocation2] sm:$0xff]
        %v693 = vld [vmem:[#allocation2 + $0x8] sm:$0xff]
        %v694 = vld [vmem:[#allocation2 + $0x10] sm:$0xff]
        %vm695 = vcmask 261120
        %v696 = vsel %vm695, %v692, 0.0
        %697 = vadd.xlane.f32.xlu0 %v696
        %v698 = vpop.xlane.xlu0 %697
        %v699 = vsel %vm695, %v693, 0.0
        %700 = vadd.xlane.f32.xlu0 %v699
        %v701 = vpop.xlane.xlu0 %700
        %v702 = vsel %vm695, %v694, 0.0
        %703 = vadd.xlane.f32.xlu0 %v702
        %v704 = vpop.xlane.xlu0 %703
        %v705 = vrcp.pop 32.0
        %v706 = vmul.f32 %v698, %v705
        %v707 = vmul.f32 %v701, %v705
        %v708 = vmul.f32 %v704, %v705
        %v709 = vsub.f32 %v692, %v706
        %v710 = vsub.f32 %v693, %v707
        %v711 = vsub.f32 %v694, %v708
        %v712 = vmul.f32 %v709, %v709
        %v713 = vmul.f32 %v710, %v710
        %v714 = vmul.f32 %v711, %v711
        %v715 = vsel %vm695, %v712, 0.0
        %716 = vadd.xlane.f32.xlu0 %v715
        %v717 = vpop.xlane.xlu0 %716
        %v718 = vsel %vm695, %v713, 0.0
        %719 = vadd.xlane.f32.xlu0 %v718
        %v720 = vpop.xlane.xlu0 %719
        %v721 = vsel %vm695, %v714, 0.0
        %722 = vadd.xlane.f32.xlu0 %v721
        %v723 = vpop.xlane.xlu0 %722
        %v724 = vmul.f32 %v717, %v705
        %v725 = vmul.f32 %v720, %v705
        %v726 = vmul.f32 %v723, %v705
        %v727 = vadd.f32 %v724, 1e-05
        %v728 = vadd.f32 %v725, 1e-05
        %v729 = vadd.f32 %v726, 1e-05
        %v730 = vrsqrt.pop %v727
        %v731 = vrsqrt.pop %v728
        %v732 = vrsqrt.pop %v729
        %v733 = vmul.f32 %v709, %v730
        %v734 = vmul.f32 %v710, %v731
        %v735 = vmul.f32 %v711, %v732
        %v736 = vlaneseq
        %v737 = vshrl.u32 %v736, 7
        %v738 = vsub.s32 0, %v737
        %v739 = vrot.slane %v691, %v738
        %v740 = vmul.f32 %v733, %v739
        %v741 = vmul.f32 %v734, %v739
        %v742 = vmul.f32 %v735, %v739
        %v743 = vlaneseq
        %v744 = vshrl.u32 %v743, 7
        %v745 = vsub.s32 1, %v744
        %v746 = vrot.slane %v691, %v745
        %v747 = vadd.f32 %v740, %v746
        %v748 = vadd.f32 %v741, %v746
        %v749 = vadd.f32 %v742, %v746
        %v750 = vld [vmem:[%s558] sm:$0xff]
        %v751 = vld [vmem:[%s558 + $0x8] sm:$0xff]
        %v752 = vld [vmem:[%s558 + $0x10] sm:$0xff]
        %v753 = vld [vmem:[%s558 + $0x18] sm:$0xff]
        %v754 = vlaneseq
        %v755 = vshrl.u32 %v754, 7
        %v756 = vsub.s32 6, %v755
        %v757 = vrot.slane %v691, %v756
        %v759 = vsel %vm695, %v747, 0
        %v762 = vsel %vm695, %v748, 0
        %v765 = vsel %vm695, %v749, 0
        %767 = vmatprep.subr.mxu0 0.0
        %768 = vmatpush1.msra.mxu0 %v750
        %769 = vmatprep.subr.mxu0 0.0
        %770 = vmatpush1.msra.mxu0 %v751
        %771 = vmatprep.subr.mxu0 0.0
        %772 = vmatpush1.msra.mxu0 %v752
        %773 = vmatprep.subr.mxu0 0.0
        %774 = vmatpush1.msra.mxu0 %v753
        %775 = vmatprep.subr.mxu0 0.0
        %776 = vmatpush1.msra.mxu0 0.0
        %777 = vmatprep.subr.mxu0 0.0
        %778 = vmatpush1.msra.mxu0 0.0
        %779 = vmatprep.subr.mxu0 0.0
        %780 = vmatpush1.msra.mxu0 0.0
        %781 = vmatprep.subr.mxu0 0.0
        %782 = vmatpush1.msra.mxu0 0.0
        %783 = vmatprep.subr.mxu0 0.0
        %784 = vmatpush1.msra.mxu0 0.0
        %785 = vmatprep.subr.mxu0 0.0
        %786 = vmatpush1.msra.mxu0 0.0
        %787 = vmatprep.subr.mxu0 0.0
        %788 = vmatpush1.msra.mxu0 0.0
        %789 = vmatprep.subr.mxu0 0.0
        %790 = vmatpush1.msra.mxu0 0.0
        %791 = vmatprep.subr.mxu0 0.0
        %792 = vmatpush1.msra.mxu0 0.0
        %793 = vmatprep.subr.mxu0 0.0
        %794 = vmatpush1.msra.mxu0 0.0
        %795 = vmatprep.subr.mxu0 0.0
        %796 = vmatpush1.msra.mxu0 0.0
        %797 = vmatprep.subr.mxu0 0.0
        %798 = vmatpush1.msra.mxu0 0.0
        %799 = vmatprep.subr.mxu0 0.0
        %800 = vmatpush1.msra.mxu0 0.0
        %801 = vmatprep.subr.mxu0 0.0
        %802 = vmatpush1.msra.mxu0 0.0
        %803 = vmatprep.subr.mxu0 0.0
        %804 = vmatpush1.msra.mxu0 0.0
        %805 = vmatprep.subr.mxu0 0.0
        %806 = vmatpush1.msra.mxu0 0.0
        %807 = vmatprep.subr.mxu0 0.0
        %808 = vmatpush1.msra.mxu0 0.0
        %809 = vmatprep.subr.mxu0 0.0
        %810 = vmatpush1.msra.mxu0 0.0
        %811 = vmatprep.subr.mxu0 0.0
        %812 = vmatpush1.msra.mxu0 0.0
        %813 = vmatprep.subr.mxu0 0.0
        %814 = vmatpush1.msra.mxu0 0.0
        %815 = vmatprep.subr.mxu0 0.0
        %816 = vmatpush1.msra.mxu0 0.0
        %817 = vmatprep.subr.mxu0 0.0
        %818 = vmatpush1.msra.mxu0 0.0
        %819 = vmatprep.subr.mxu0 0.0
        %820 = vmatpush1.msra.mxu0 0.0
        %821 = vmatprep.subr.mxu0 0.0
        %822 = vmatpush1.msra.mxu0 0.0
        %823 = vmatprep.subr.mxu0 0.0
        %824 = vmatpush1.msra.mxu0 0.0
        %825 = vmatprep.subr.mxu0 0.0
        %826 = vmatpush1.msra.mxu0 0.0
        %827 = vmatprep.subr.mxu0 0.0
        %828 = vmatpush1.msra.mxu0 0.0
        %829 = vmatprep.subr.mxu0 0.0
        %830 = vmatpush1.msra.mxu0 0.0
        %831 = vmatprep.mubr.f32.mxu0 0.0
        %832 = vmatmul.mubr.f32.gmra.mrb[0].mxu0 %v759
        %v833 = vpop.f32.mrb[0].mxu0
        %v834 = vadd.f32 %v757, %v833
        %v835 = vpop.f32.mrb[0].mxu0
        %836 = vmatprep.mubr.f32.mxu0 0.0
        %837 = vmatmul.mubr.f32.gmra.mrb[0].mxu0 %v762
        %v838 = vpop.f32.mrb[0].mxu0
        %v839 = vadd.f32 %v757, %v838
        %v840 = vpop.f32.mrb[0].mxu0
        %841 = vmatprep.mubr.f32.mxu0 0.0
        %842 = vmatmul.mubr.f32.gmra.mrb[0].mxu0 %v765
        %v843 = vpop.f32.mrb[0].mxu0
        %v844 = vadd.f32 %v757, %v843
        %v845 = vpop.f32.mrb[0].mxu0
        %846 = vdwg.mxu0
        %v847 = vlaneseq
        %v848 = vand.u32 %v847, 127
        %vm849 = vcmp.lt.s32.totalorder %v848, 17
        %v850 = vsel %vm849, 0.0, -1e+30
        %854 = vrot.lane.b32.xlu0 %v834, 96
        %v855 = vpop.permute.xlu0 %854
        %856 = vrot.lane.b32.xlu0 %v839, 96
        %v857 = vpop.permute.xlu0 %856
        %858 = vrot.lane.b32.xlu0 %v844, 96
        %v859 = vpop.permute.xlu0 %858
        %vm860 = vcmask 64512
        %v861 = vsel %vm860, %v834, 0
        %v863 = vsel %vm860, %v839, 0
        %v865 = vsel %vm860, %v844, 0
        %v867 = vsel %vm860, %v855, 0
        %v869 = vsel %vm860, %v857, 0
        %v871 = vsel %vm860, %v859, 0
        %873 = vmatprep.subr.mxu0 0.0
        %874 = vmatpush1.xpose.msra.mxu0 %v867
        %875 = vmatprep.subr.mxu0 0.0
        %876 = vmatpush1.xpose.msra.mxu0 %v869
        %877 = vmatprep.subr.mxu0 0.0
        %878 = vmatpush1.xpose.msra.mxu0 %v871
        %879 = vmatprep.subr.mxu0 0.0
        %880 = vmatpush1.xpose.msra.mxu0 0.0
        %881 = vmatprep.subr.mxu0 0.0
        %882 = vmatpush1.xpose.msra.mxu0 0.0
        %883 = vmatprep.subr.mxu0 0.0
        %884 = vmatpush1.xpose.msra.mxu0 0.0
        %885 = vmatprep.subr.mxu0 0.0
        %886 = vmatpush1.xpose.msra.mxu0 0.0
        %887 = vmatprep.subr.mxu0 0.0
        %888 = vmatpush1.xpose.msra.mxu0 0.0
        %889 = vmatprep.subr.mxu0 0.0
        %890 = vmatpush1.xpose.msra.mxu0 0.0
        %891 = vmatprep.subr.mxu0 0.0
        %892 = vmatpush1.xpose.msra.mxu0 0.0
        %893 = vmatprep.subr.mxu0 0.0
        %894 = vmatpush1.xpose.msra.mxu0 0.0
        %895 = vmatprep.subr.mxu0 0.0
        %896 = vmatpush1.xpose.msra.mxu0 0.0
        %897 = vmatprep.subr.mxu0 0.0
        %898 = vmatpush1.xpose.msra.mxu0 0.0
        %899 = vmatprep.subr.mxu0 0.0
        %900 = vmatpush1.xpose.msra.mxu0 0.0
        %901 = vmatprep.subr.mxu0 0.0
        %902 = vmatpush1.xpose.msra.mxu0 0.0
        %903 = vmatprep.subr.mxu0 0.0
        %904 = vmatpush1.xpose.msra.mxu0 0.0
        %905 = vmatprep.subr.mxu0 0.0
        %906 = vmatpush1.xpose.msra.mxu0 0.0
        %907 = vmatprep.subr.mxu0 0.0
        %908 = vmatpush1.xpose.msra.mxu0 0.0
        %909 = vmatprep.subr.mxu0 0.0
        %910 = vmatpush1.xpose.msra.mxu0 0.0
        %911 = vmatprep.subr.mxu0 0.0
        %912 = vmatpush1.xpose.msra.mxu0 0.0
        %913 = vmatprep.subr.mxu0 0.0
        %914 = vmatpush1.xpose.msra.mxu0 0.0
        %915 = vmatprep.subr.mxu0 0.0
        %916 = vmatpush1.xpose.msra.mxu0 0.0
        %917 = vmatprep.subr.mxu0 0.0
        %918 = vmatpush1.xpose.msra.mxu0 0.0
        %919 = vmatprep.subr.mxu0 0.0
        %920 = vmatpush1.xpose.msra.mxu0 0.0
        %921 = vmatprep.subr.mxu0 0.0
        %922 = vmatpush1.xpose.msra.mxu0 0.0
        %923 = vmatprep.subr.mxu0 0.0
        %924 = vmatpush1.xpose.msra.mxu0 0.0
        %925 = vmatprep.subr.mxu0 0.0
        %926 = vmatpush1.xpose.msra.mxu0 0.0
        %927 = vmatprep.subr.mxu0 0.0
        %928 = vmatpush1.xpose.msra.mxu0 0.0
        %929 = vmatprep.subr.mxu0 0.0
        %930 = vmatpush1.xpose.msra.mxu0 0.0
        %931 = vmatprep.subr.mxu0 0.0
        %932 = vmatpush1.xpose.msra.mxu0 0.0
        %933 = vmatprep.subr.mxu0 0.0
        %934 = vmatpush1.xpose.msra.mxu0 0.0
        %935 = vmatprep.subr.mxu0 0.0
        %936 = vmatpush1.xpose.msra.mxu0 0.0
        %937 = vmatprep.mubr.f32.mxu0 0.0
        %938 = vmatmul.mubr.f32.gmra.mrb[0].mxu0 %v861
        %v939 = vpop.f32.mrb[0].mxu0
        %v940 = vadd.f32 %v850, %v939
        %v941 = vpop.f32.mrb[0].mxu0
        %942 = vmatprep.mubr.f32.mxu0 0.0
        %943 = vmatmul.mubr.f32.gmra.mrb[0].mxu0 %v863
        %v944 = vpop.f32.mrb[0].mxu0
        %v945 = vadd.f32 %v850, %v944
        %v946 = vpop.f32.mrb[0].mxu0
        %947 = vmatprep.mubr.f32.mxu0 0.0
        %948 = vmatmul.mubr.f32.gmra.mrb[0].mxu0 %v865
        %v949 = vpop.f32.mrb[0].mxu0
        %v950 = vadd.f32 %v850, %v949
        %v951 = vpop.f32.mrb[0].mxu0
        %952 = vdwg.mxu0
        %vm953 = vcmask 195584
        %v954 = vsel %vm953, %v940, -inf
        %955 = vmax.xlane.f32.xlu0 %v954
        %v956 = vpop.xlane.xlu0 %955
        %v957 = vsel %vm953, %v945, -inf
        %958 = vmax.xlane.f32.xlu0 %v957
        %v959 = vpop.xlane.xlu0 %958
        %v960 = vsel %vm953, %v950, -inf
        %961 = vmax.xlane.f32.xlu0 %v960
        %v962 = vpop.xlane.xlu0 %961
        %v963 = vsub.f32 %v940, %v956
        %v964 = vsub.f32 %v945, %v959
        %v965 = vsub.f32 %v950, %v962
        %v966 = vmul.f32 %v963, 1.442695
        %v967 = vpow.pop %v966
        %v968 = vmul.f32 %v964, 1.442695
        %v969 = vpow.pop %v968
        %v970 = vmul.f32 %v965, 1.442695
        %v971 = vpow.pop %v970
        %v972 = vsel %vm953, %v967, 0.0
        %973 = vadd.xlane.f32.xlu0 %v972
        %v974 = vpop.xlane.xlu0 %973
        %v975 = vsel %vm953, %v969, 0.0
        %976 = vadd.xlane.f32.xlu0 %v975
        %v977 = vpop.xlane.xlu0 %976
        %v978 = vsel %vm953, %v971, 0.0
        %979 = vadd.xlane.f32.xlu0 %v978
        %v980 = vpop.xlane.xlu0 %979
        %v981 = vrcp.pop %v974
        %v982 = vmul.f32 %v967, %v981
        %v983 = vrcp.pop %v977
        %v984 = vmul.f32 %v969, %v983
        %v985 = vrcp.pop %v980
        %v986 = vmul.f32 %v971, %v985
        %987 = vrot.lane.b32.xlu0 %v834, 64
        %v988 = vpop.permute.xlu0 %987
        %989 = vrot.lane.b32.xlu0 %v839, 64
        %v990 = vpop.permute.xlu0 %989
        %991 = vrot.lane.b32.xlu0 %v844, 64
        %v992 = vpop.permute.xlu0 %991
        %v997 = vsel %vm953, %v982, 0
        %v1000 = vsel %vm953, %v984, 0
        %v1003 = vsel %vm953, %v986, 0
        %1005 = vmatprep.subr.mxu0 0.0
        %1006 = vmatpush1.msra.mxu0 %v988
        %1007 = vmatprep.subr.mxu0 0.0
        %1008 = vmatpush1.msra.mxu0 %v990
        %1009 = vmatprep.subr.mxu0 0.0
        %1010 = vmatpush1.msra.mxu0 %v992
        %1011 = vmatprep.subr.mxu0 0.0
        %1012 = vmatpush1.msra.mxu0 0.0
        %1013 = vmatprep.subr.mxu0 0.0
        %1014 = vmatpush1.msra.mxu0 0.0
        %1015 = vmatprep.subr.mxu0 0.0
        %1016 = vmatpush1.msra.mxu0 0.0
        %1017 = vmatprep.subr.mxu0 0.0
        %1018 = vmatpush1.msra.mxu0 0.0
        %1019 = vmatprep.subr.mxu0 0.0
        %1020 = vmatpush1.msra.mxu0 0.0
        %1021 = vmatprep.subr.mxu0 0.0
        %1022 = vmatpush1.msra.mxu0 0.0
        %1023 = vmatprep.subr.mxu0 0.0
        %1024 = vmatpush1.msra.mxu0 0.0
        %1025 = vmatprep.subr.mxu0 0.0
        %1026 = vmatpush1.msra.mxu0 0.0
        %1027 = vmatprep.subr.mxu0 0.0
        %1028 = vmatpush1.msra.mxu0 0.0
        %1029 = vmatprep.subr.mxu0 0.0
        %1030 = vmatpush1.msra.mxu0 0.0
        %1031 = vmatprep.subr.mxu0 0.0
        %1032 = vmatpush1.msra.mxu0 0.0
        %1033 = vmatprep.subr.mxu0 0.0
        %1034 = vmatpush1.msra.mxu0 0.0
        %1035 = vmatprep.subr.mxu0 0.0
        %1036 = vmatpush1.msra.mxu0 0.0
        %1037 = vmatprep.subr.mxu0 0.0
        %1038 = vmatpush1.msra.mxu0 0.0
        %1039 = vmatprep.subr.mxu0 0.0
        %1040 = vmatpush1.msra.mxu0 0.0
        %1041 = vmatprep.subr.mxu0 0.0
        %1042 = vmatpush1.msra.mxu0 0.0
        %1043 = vmatprep.subr.mxu0 0.0
        %1044 = vmatpush1.msra.mxu0 0.0
        %1045 = vmatprep.subr.mxu0 0.0
        %1046 = vmatpush1.msra.mxu0 0.0
        %1047 = vmatprep.subr.mxu0 0.0
        %1048 = vmatpush1.msra.mxu0 0.0
        %1049 = vmatprep.subr.mxu0 0.0
        %1050 = vmatpush1.msra.mxu0 0.0
        %1051 = vmatprep.subr.mxu0 0.0
        %1052 = vmatpush1.msra.mxu0 0.0
        %1053 = vmatprep.subr.mxu0 0.0
        %1054 = vmatpush1.msra.mxu0 0.0
        %1055 = vmatprep.subr.mxu0 0.0
        %1056 = vmatpush1.msra.mxu0 0.0
        %1057 = vmatprep.subr.mxu0 0.0
        %1058 = vmatpush1.msra.mxu0 0.0
        %1059 = vmatprep.subr.mxu0 0.0
        %1060 = vmatpush1.msra.mxu0 0.0
        %1061 = vmatprep.subr.mxu0 0.0
        %1062 = vmatpush1.msra.mxu0 0.0
        %1063 = vmatprep.subr.mxu0 0.0
        %1064 = vmatpush1.msra.mxu0 0.0
        %1065 = vmatprep.subr.mxu0 0.0
        %1066 = vmatpush1.msra.mxu0 0.0
        %1067 = vmatprep.subr.mxu0 0.0
        %1068 = vmatpush1.msra.mxu0 0.0
        %1069 = vmatprep.mubr.f32.mxu0 0.0
        %1070 = vmatmul.mubr.f32.gmra.mrb[0].mxu0 %v997
        %v1071 = vpop.f32.mrb[0].mxu0
        %v1072 = vadd.f32 0.0, %v1071
        %v1073 = vpop.f32.mrb[0].mxu0
        %1074 = vmatprep.mubr.f32.mxu0 0.0
        %1075 = vmatmul.mubr.f32.gmra.mrb[0].mxu0 %v1000
        %v1076 = vpop.f32.mrb[0].mxu0
        %v1077 = vadd.f32 0.0, %v1076
        %v1078 = vpop.f32.mrb[0].mxu0
        %1079 = vmatprep.mubr.f32.mxu0 0.0
        %1080 = vmatmul.mubr.f32.gmra.mrb[0].mxu0 %v1003
        %v1081 = vpop.f32.mrb[0].mxu0
        %v1082 = vadd.f32 0.0, %v1081
        %v1083 = vpop.f32.mrb[0].mxu0
        %1084 = vdwg.mxu0
        %1085 = vrot.lane.b32.xlu0 %v834, 120
        %v1086 = vpop.permute.xlu0 %1085
        %1087 = vrot.lane.b32.xlu0 %v839, 120
        %v1088 = vpop.permute.xlu0 %1087
        %1089 = vrot.lane.b32.xlu0 %v844, 120
        %v1090 = vpop.permute.xlu0 %1089
        %1091 = vrot.lane.b32.xlu0 %v834, 88
        %v1092 = vpop.permute.xlu0 %1091
        %1093 = vrot.lane.b32.xlu0 %v839, 88
        %v1094 = vpop.permute.xlu0 %1093
        %1095 = vrot.lane.b32.xlu0 %v844, 88
        %v1096 = vpop.permute.xlu0 %1095
        %v1097 = vsel %vm860, %v1086, 0
        %v1099 = vsel %vm860, %v1088, 0
        %v1101 = vsel %vm860, %v1090, 0
        %v1103 = vsel %vm860, %v1092, 0
        %v1105 = vsel %vm860, %v1094, 0
        %v1107 = vsel %vm860, %v1096, 0
        %1109 = vmatprep.subr.mxu0 0.0
        %1110 = vmatpush1.xpose.msra.mxu0 %v1103
        %1111 = vmatprep.subr.mxu0 0.0
        %1112 = vmatpush1.xpose.msra.mxu0 %v1105
        %1113 = vmatprep.subr.mxu0 0.0
        %1114 = vmatpush1.xpose.msra.mxu0 %v1107
        %1115 = vmatprep.subr.mxu0 0.0
        %1116 = vmatpush1.xpose.msra.mxu0 0.0
        %1117 = vmatprep.subr.mxu0 0.0
        %1118 = vmatpush1.xpose.msra.mxu0 0.0
        %1119 = vmatprep.subr.mxu0 0.0
        %1120 = vmatpush1.xpose.msra.mxu0 0.0
        %1121 = vmatprep.subr.mxu0 0.0
        %1122 = vmatpush1.xpose.msra.mxu0 0.0
        %1123 = vmatprep.subr.mxu0 0.0
        %1124 = vmatpush1.xpose.msra.mxu0 0.0
        %1125 = vmatprep.subr.mxu0 0.0
        %1126 = vmatpush1.xpose.msra.mxu0 0.0
        %1127 = vmatprep.subr.mxu0 0.0
        %1128 = vmatpush1.xpose.msra.mxu0 0.0
        %1129 = vmatprep.subr.mxu0 0.0
        %1130 = vmatpush1.xpose.msra.mxu0 0.0
        %1131 = vmatprep.subr.mxu0 0.0
        %1132 = vmatpush1.xpose.msra.mxu0 0.0
        %1133 = vmatprep.subr.mxu0 0.0
        %1134 = vmatpush1.xpose.msra.mxu0 0.0
        %1135 = vmatprep.subr.mxu0 0.0
        %1136 = vmatpush1.xpose.msra.mxu0 0.0
        %1137 = vmatprep.subr.mxu0 0.0
        %1138 = vmatpush1.xpose.msra.mxu0 0.0
        %1139 = vmatprep.subr.mxu0 0.0
        %1140 = vmatpush1.xpose.msra.mxu0 0.0
        %1141 = vmatprep.subr.mxu0 0.0
        %1142 = vmatpush1.xpose.msra.mxu0 0.0
        %1143 = vmatprep.subr.mxu0 0.0
        %1144 = vmatpush1.xpose.msra.mxu0 0.0
        %1145 = vmatprep.subr.mxu0 0.0
        %1146 = vmatpush1.xpose.msra.mxu0 0.0
        %1147 = vmatprep.subr.mxu0 0.0
        %1148 = vmatpush1.xpose.msra.mxu0 0.0
        %1149 = vmatprep.subr.mxu0 0.0
        %1150 = vmatpush1.xpose.msra.mxu0 0.0
        %1151 = vmatprep.subr.mxu0 0.0
        %1152 = vmatpush1.xpose.msra.mxu0 0.0
        %1153 = vmatprep.subr.mxu0 0.0
        %1154 = vmatpush1.xpose.msra.mxu0 0.0
        %1155 = vmatprep.subr.mxu0 0.0
        %1156 = vmatpush1.xpose.msra.mxu0 0.0
        %1157 = vmatprep.subr.mxu0 0.0
        %1158 = vmatpush1.xpose.msra.mxu0 0.0
        %1159 = vmatprep.subr.mxu0 0.0
        %1160 = vmatpush1.xpose.msra.mxu0 0.0
        %1161 = vmatprep.subr.mxu0 0.0
        %1162 = vmatpush1.xpose.msra.mxu0 0.0
        %1163 = vmatprep.subr.mxu0 0.0
        %1164 = vmatpush1.xpose.msra.mxu0 0.0
        %1165 = vmatprep.subr.mxu0 0.0
        %1166 = vmatpush1.xpose.msra.mxu0 0.0
        %1167 = vmatprep.subr.mxu0 0.0
        %1168 = vmatpush1.xpose.msra.mxu0 0.0
        %1169 = vmatprep.subr.mxu0 0.0
        %1170 = vmatpush1.xpose.msra.mxu0 0.0
        %1171 = vmatprep.subr.mxu0 0.0
        %1172 = vmatpush1.xpose.msra.mxu0 0.0
        %1173 = vmatprep.mubr.f32.mxu0 0.0
        %1174 = vmatmul.mubr.f32.gmra.mrb[0].mxu0 %v1097
        %v1175 = vpop.f32.mrb[0].mxu0
        %v1176 = vadd.f32 %v850, %v1175
        %v1177 = vpop.f32.mrb[0].mxu0
        %1178 = vmatprep.mubr.f32.mxu0 0.0
        %1179 = vmatmul.mubr.f32.gmra.mrb[0].mxu0 %v1099
        %v1180 = vpop.f32.mrb[0].mxu0
        %v1181 = vadd.f32 %v850, %v1180
        %v1182 = vpop.f32.mrb[0].mxu0
        %1183 = vmatprep.mubr.f32.mxu0 0.0
        %1184 = vmatmul.mubr.f32.gmra.mrb[0].mxu0 %v1101
        %v1185 = vpop.f32.mrb[0].mxu0
        %v1186 = vadd.f32 %v850, %v1185
        %v1187 = vpop.f32.mrb[0].mxu0
        %1188 = vdwg.mxu0
        %v1189 = vsel %vm953, %v1176, -inf
        %1190 = vmax.xlane.f32.xlu0 %v1189
        %v1191 = vpop.xlane.xlu0 %1190
        %v1192 = vsel %vm953, %v1181, -inf
        %1193 = vmax.xlane.f32.xlu0 %v1192
        %v1194 = vpop.xlane.xlu0 %1193
        %v1195 = vsel %vm953, %v1186, -inf
        %1196 = vmax.xlane.f32.xlu0 %v1195
        %v1197 = vpop.xlane.xlu0 %1196
        %v1198 = vsub.f32 %v1176, %v1191
        %v1199 = vsub.f32 %v1181, %v1194
        %v1200 = vsub.f32 %v1186, %v1197
        %v1201 = vmul.f32 %v1198, 1.442695
        %v1202 = vpow.pop %v1201
        %v1203 = vmul.f32 %v1199, 1.442695
        %v1204 = vpow.pop %v1203
        %v1205 = vmul.f32 %v1200, 1.442695
        %v1206 = vpow.pop %v1205
        %v1207 = vsel %vm953, %v1202, 0.0
        %1208 = vadd.xlane.f32.xlu0 %v1207
        %v1209 = vpop.xlane.xlu0 %1208
        %v1210 = vsel %vm953, %v1204, 0.0
        %1211 = vadd.xlane.f32.xlu0 %v1210
        %v1212 = vpop.xlane.xlu0 %1211
        %v1213 = vsel %vm953, %v1206, 0.0
        %1214 = vadd.xlane.f32.xlu0 %v1213
        %v1215 = vpop.xlane.xlu0 %1214
        %v1216 = vrcp.pop %v1209
        %v1217 = vmul.f32 %v1202, %v1216
        %v1218 = vrcp.pop %v1212
        %v1219 = vmul.f32 %v1204, %v1218
        %v1220 = vrcp.pop %v1215
        %v1221 = vmul.f32 %v1206, %v1220
        %1222 = vrot.lane.b32.xlu0 %v834, 56
        %v1223 = vpop.permute.xlu0 %1222
        %1224 = vrot.lane.b32.xlu0 %v839, 56
        %v1225 = vpop.permute.xlu0 %1224
        %1226 = vrot.lane.b32.xlu0 %v844, 56
        %v1227 = vpop.permute.xlu0 %1226
        %v1232 = vsel %vm953, %v1217, 0
        %v1235 = vsel %vm953, %v1219, 0
        %v1238 = vsel %vm953, %v1221, 0
        %1240 = vmatprep.subr.mxu0 0.0
        %1241 = vmatpush1.msra.mxu0 %v1223
        %1242 = vmatprep.subr.mxu0 0.0
        %1243 = vmatpush1.msra.mxu0 %v1225
        %1244 = vmatprep.subr.mxu0 0.0
        %1245 = vmatpush1.msra.mxu0 %v1227
        %1246 = vmatprep.subr.mxu0 0.0
        %1247 = vmatpush1.msra.mxu0 0.0
        %1248 = vmatprep.subr.mxu0 0.0
        %1249 = vmatpush1.msra.mxu0 0.0
        %1250 = vmatprep.subr.mxu0 0.0
        %1251 = vmatpush1.msra.mxu0 0.0
        %1252 = vmatprep.subr.mxu0 0.0
        %1253 = vmatpush1.msra.mxu0 0.0
        %1254 = vmatprep.subr.mxu0 0.0
        %1255 = vmatpush1.msra.mxu0 0.0
        %1256 = vmatprep.subr.mxu0 0.0
        %1257 = vmatpush1.msra.mxu0 0.0
        %1258 = vmatprep.subr.mxu0 0.0
        %1259 = vmatpush1.msra.mxu0 0.0
        %1260 = vmatprep.subr.mxu0 0.0
        %1261 = vmatpush1.msra.mxu0 0.0
        %1262 = vmatprep.subr.mxu0 0.0
        %1263 = vmatpush1.msra.mxu0 0.0
        %1264 = vmatprep.subr.mxu0 0.0
        %1265 = vmatpush1.msra.mxu0 0.0
        %1266 = vmatprep.subr.mxu0 0.0
        %1267 = vmatpush1.msra.mxu0 0.0
        %1268 = vmatprep.subr.mxu0 0.0
        %1269 = vmatpush1.msra.mxu0 0.0
        %1270 = vmatprep.subr.mxu0 0.0
        %1271 = vmatpush1.msra.mxu0 0.0
        %1272 = vmatprep.subr.mxu0 0.0
        %1273 = vmatpush1.msra.mxu0 0.0
        %1274 = vmatprep.subr.mxu0 0.0
        %1275 = vmatpush1.msra.mxu0 0.0
        %1276 = vmatprep.subr.mxu0 0.0
        %1277 = vmatpush1.msra.mxu0 0.0
        %1278 = vmatprep.subr.mxu0 0.0
        %1279 = vmatpush1.msra.mxu0 0.0
        %1280 = vmatprep.subr.mxu0 0.0
        %1281 = vmatpush1.msra.mxu0 0.0
        %1282 = vmatprep.subr.mxu0 0.0
        %1283 = vmatpush1.msra.mxu0 0.0
        %1284 = vmatprep.subr.mxu0 0.0
        %1285 = vmatpush1.msra.mxu0 0.0
        %1286 = vmatprep.subr.mxu0 0.0
        %1287 = vmatpush1.msra.mxu0 0.0
        %1288 = vmatprep.subr.mxu0 0.0
        %1289 = vmatpush1.msra.mxu0 0.0
        %1290 = vmatprep.subr.mxu0 0.0
        %1291 = vmatpush1.msra.mxu0 0.0
        %1292 = vmatprep.subr.mxu0 0.0
        %1293 = vmatpush1.msra.mxu0 0.0
        %1294 = vmatprep.subr.mxu0 0.0
        %1295 = vmatpush1.msra.mxu0 0.0
        %1296 = vmatprep.subr.mxu0 0.0
        %1297 = vmatpush1.msra.mxu0 0.0
        %1298 = vmatprep.subr.mxu0 0.0
        %1299 = vmatpush1.msra.mxu0 0.0
        %1300 = vmatprep.subr.mxu0 0.0
        %1301 = vmatpush1.msra.mxu0 0.0
        %1302 = vmatprep.subr.mxu0 0.0
        %1303 = vmatpush1.msra.mxu0 0.0
        %1304 = vmatprep.mubr.f32.mxu0 0.0
        %1305 = vmatmul.mubr.f32.gmra.mrb[0].mxu0 %v1232
        %v1306 = vpop.f32.mrb[0].mxu0
        %v1307 = vadd.f32 0.0, %v1306
        %v1308 = vpop.f32.mrb[0].mxu0
        %1309 = vmatprep.mubr.f32.mxu0 0.0
        %1310 = vmatmul.mubr.f32.gmra.mrb[0].mxu0 %v1235
        %v1311 = vpop.f32.mrb[0].mxu0
        %v1312 = vadd.f32 0.0, %v1311
        %v1313 = vpop.f32.mrb[0].mxu0
        %1314 = vmatprep.mubr.f32.mxu0 0.0
        %1315 = vmatmul.mubr.f32.gmra.mrb[0].mxu0 %v1238
        %v1316 = vpop.f32.mrb[0].mxu0
        %v1317 = vadd.f32 0.0, %v1316
        %v1318 = vpop.f32.mrb[0].mxu0
        %1319 = vdwg.mxu0
        %1320 = vrot.lane.b32.xlu0 %v834, 112
        %v1321 = vpop.permute.xlu0 %1320
        %1322 = vrot.lane.b32.xlu0 %v839, 112
        %v1323 = vpop.permute.xlu0 %1322
        %1324 = vrot.lane.b32.xlu0 %v844, 112
        %v1325 = vpop.permute.xlu0 %1324
        %1326 = vrot.lane.b32.xlu0 %v834, 80
        %v1327 = vpop.permute.xlu0 %1326
        %1328 = vrot.lane.b32.xlu0 %v839, 80
        %v1329 = vpop.permute.xlu0 %1328
        %1330 = vrot.lane.b32.xlu0 %v844, 80
        %v1331 = vpop.permute.xlu0 %1330
        %v1332 = vsel %vm860, %v1321, 0
        %v1334 = vsel %vm860, %v1323, 0
        %v1336 = vsel %vm860, %v1325, 0
        %v1338 = vsel %vm860, %v1327, 0
        %v1340 = vsel %vm860, %v1329, 0
        %v1342 = vsel %vm860, %v1331, 0
        %1344 = vmatprep.subr.mxu0 0.0
        %1345 = vmatpush1.xpose.msra.mxu0 %v1338
        %1346 = vmatprep.subr.mxu0 0.0
        %1347 = vmatpush1.xpose.msra.mxu0 %v1340
        %1348 = vmatprep.subr.mxu0 0.0
        %1349 = vmatpush1.xpose.msra.mxu0 %v1342
        %1350 = vmatprep.subr.mxu0 0.0
        %1351 = vmatpush1.xpose.msra.mxu0 0.0
        %1352 = vmatprep.subr.mxu0 0.0
        %1353 = vmatpush1.xpose.msra.mxu0 0.0
        %1354 = vmatprep.subr.mxu0 0.0
        %1355 = vmatpush1.xpose.msra.mxu0 0.0
        %1356 = vmatprep.subr.mxu0 0.0
        %1357 = vmatpush1.xpose.msra.mxu0 0.0
        %1358 = vmatprep.subr.mxu0 0.0
        %1359 = vmatpush1.xpose.msra.mxu0 0.0
        %1360 = vmatprep.subr.mxu0 0.0
        %1361 = vmatpush1.xpose.msra.mxu0 0.0
        %1362 = vmatprep.subr.mxu0 0.0
        %1363 = vmatpush1.xpose.msra.mxu0 0.0
        %1364 = vmatprep.subr.mxu0 0.0
        %1365 = vmatpush1.xpose.msra.mxu0 0.0
        %1366 = vmatprep.subr.mxu0 0.0
        %1367 = vmatpush1.xpose.msra.mxu0 0.0
        %1368 = vmatprep.subr.mxu0 0.0
        %1369 = vmatpush1.xpose.msra.mxu0 0.0
        %1370 = vmatprep.subr.mxu0 0.0
        %1371 = vmatpush1.xpose.msra.mxu0 0.0
        %1372 = vmatprep.subr.mxu0 0.0
        %1373 = vmatpush1.xpose.msra.mxu0 0.0
        %1374 = vmatprep.subr.mxu0 0.0
        %1375 = vmatpush1.xpose.msra.mxu0 0.0
        %1376 = vmatprep.subr.mxu0 0.0
        %1377 = vmatpush1.xpose.msra.mxu0 0.0
        %1378 = vmatprep.subr.mxu0 0.0
        %1379 = vmatpush1.xpose.msra.mxu0 0.0
        %1380 = vmatprep.subr.mxu0 0.0
        %1381 = vmatpush1.xpose.msra.mxu0 0.0
        %1382 = vmatprep.subr.mxu0 0.0
        %1383 = vmatpush1.xpose.msra.mxu0 0.0
        %1384 = vmatprep.subr.mxu0 0.0
        %1385 = vmatpush1.xpose.msra.mxu0 0.0
        %1386 = vmatprep.subr.mxu0 0.0
        %1387 = vmatpush1.xpose.msra.mxu0 0.0
        %1388 = vmatprep.subr.mxu0 0.0
        %1389 = vmatpush1.xpose.msra.mxu0 0.0
        %1390 = vmatprep.subr.mxu0 0.0
        %1391 = vmatpush1.xpose.msra.mxu0 0.0
        %1392 = vmatprep.subr.mxu0 0.0
        %1393 = vmatpush1.xpose.msra.mxu0 0.0
        %1394 = vmatprep.subr.mxu0 0.0
        %1395 = vmatpush1.xpose.msra.mxu0 0.0
        %1396 = vmatprep.subr.mxu0 0.0
        %1397 = vmatpush1.xpose.msra.mxu0 0.0
        %1398 = vmatprep.subr.mxu0 0.0
        %1399 = vmatpush1.xpose.msra.mxu0 0.0
        %1400 = vmatprep.subr.mxu0 0.0
        %1401 = vmatpush1.xpose.msra.mxu0 0.0
        %1402 = vmatprep.subr.mxu0 0.0
        %1403 = vmatpush1.xpose.msra.mxu0 0.0
        %1404 = vmatprep.subr.mxu0 0.0
        %1405 = vmatpush1.xpose.msra.mxu0 0.0
        %1406 = vmatprep.subr.mxu0 0.0
        %1407 = vmatpush1.xpose.msra.mxu0 0.0
        %1408 = vmatprep.mubr.f32.mxu0 0.0
        %1409 = vmatmul.mubr.f32.gmra.mrb[0].mxu0 %v1332
        %v1410 = vpop.f32.mrb[0].mxu0
        %v1411 = vadd.f32 %v850, %v1410
        %v1412 = vpop.f32.mrb[0].mxu0
        %1413 = vmatprep.mubr.f32.mxu0 0.0
        %1414 = vmatmul.mubr.f32.gmra.mrb[0].mxu0 %v1334
        %v1415 = vpop.f32.mrb[0].mxu0
        %v1416 = vadd.f32 %v850, %v1415
        %v1417 = vpop.f32.mrb[0].mxu0
        %1418 = vmatprep.mubr.f32.mxu0 0.0
        %1419 = vmatmul.mubr.f32.gmra.mrb[0].mxu0 %v1336
        %v1420 = vpop.f32.mrb[0].mxu0
        %v1421 = vadd.f32 %v850, %v1420
        %v1422 = vpop.f32.mrb[0].mxu0
        %1423 = vdwg.mxu0
        %v1424 = vsel %vm953, %v1411, -inf
        %1425 = vmax.xlane.f32.xlu0 %v1424
        %v1426 = vpop.xlane.xlu0 %1425
        %v1427 = vsel %vm953, %v1416, -inf
        %1428 = vmax.xlane.f32.xlu0 %v1427
        %v1429 = vpop.xlane.xlu0 %1428
        %v1430 = vsel %vm953, %v1421, -inf
        %1431 = vmax.xlane.f32.xlu0 %v1430
        %v1432 = vpop.xlane.xlu0 %1431
        %v1433 = vsub.f32 %v1411, %v1426
        %v1434 = vsub.f32 %v1416, %v1429
        %v1435 = vsub.f32 %v1421, %v1432
        %v1436 = vmul.f32 %v1433, 1.442695
        %v1437 = vpow.pop %v1436
        %v1438 = vmul.f32 %v1434, 1.442695
        %v1439 = vpow.pop %v1438
        %v1440 = vmul.f32 %v1435, 1.442695
        %v1441 = vpow.pop %v1440
        %v1442 = vsel %vm953, %v1437, 0.0
        %1443 = vadd.xlane.f32.xlu0 %v1442
        %v1444 = vpop.xlane.xlu0 %1443
        %v1445 = vsel %vm953, %v1439, 0.0
        %1446 = vadd.xlane.f32.xlu0 %v1445
        %v1447 = vpop.xlane.xlu0 %1446
        %v1448 = vsel %vm953, %v1441, 0.0
        %1449 = vadd.xlane.f32.xlu0 %v1448
        %v1450 = vpop.xlane.xlu0 %1449
        %v1451 = vrcp.pop %v1444
        %v1452 = vmul.f32 %v1437, %v1451
        %v1453 = vrcp.pop %v1447
        %v1454 = vmul.f32 %v1439, %v1453
        %v1455 = vrcp.pop %v1450
        %v1456 = vmul.f32 %v1441, %v1455
        %1457 = vrot.lane.b32.xlu0 %v834, 48
        %v1458 = vpop.permute.xlu0 %1457
        %1459 = vrot.lane.b32.xlu0 %v839, 48
        %v1460 = vpop.permute.xlu0 %1459
        %1461 = vrot.lane.b32.xlu0 %v844, 48
        %v1462 = vpop.permute.xlu0 %1461
        %v1467 = vsel %vm953, %v1452, 0
        %v1470 = vsel %vm953, %v1454, 0
        %v1473 = vsel %vm953, %v1456, 0
        %1475 = vmatprep.subr.mxu0 0.0
        %1476 = vmatpush1.msra.mxu0 %v1458
        %1477 = vmatprep.subr.mxu0 0.0
        %1478 = vmatpush1.msra.mxu0 %v1460
        %1479 = vmatprep.subr.mxu0 0.0
        %1480 = vmatpush1.msra.mxu0 %v1462
        %1481 = vmatprep.subr.mxu0 0.0
        %1482 = vmatpush1.msra.mxu0 0.0
        %1483 = vmatprep.subr.mxu0 0.0
        %1484 = vmatpush1.msra.mxu0 0.0
        %1485 = vmatprep.subr.mxu0 0.0
        %1486 = vmatpush1.msra.mxu0 0.0
        %1487 = vmatprep.subr.mxu0 0.0
        %1488 = vmatpush1.msra.mxu0 0.0
        %1489 = vmatprep.subr.mxu0 0.0
        %1490 = vmatpush1.msra.mxu0 0.0
        %1491 = vmatprep.subr.mxu0 0.0
        %1492 = vmatpush1.msra.mxu0 0.0
        %1493 = vmatprep.subr.mxu0 0.0
        %1494 = vmatpush1.msra.mxu0 0.0
        %1495 = vmatprep.subr.mxu0 0.0
        %1496 = vmatpush1.msra.mxu0 0.0
        %1497 = vmatprep.subr.mxu0 0.0
        %1498 = vmatpush1.msra.mxu0 0.0
        %1499 = vmatprep.subr.mxu0 0.0
        %1500 = vmatpush1.msra.mxu0 0.0
        %1501 = vmatprep.subr.mxu0 0.0
        %1502 = vmatpush1.msra.mxu0 0.0
        %1503 = vmatprep.subr.mxu0 0.0
        %1504 = vmatpush1.msra.mxu0 0.0
        %1505 = vmatprep.subr.mxu0 0.0
        %1506 = vmatpush1.msra.mxu0 0.0
        %1507 = vmatprep.subr.mxu0 0.0
        %1508 = vmatpush1.msra.mxu0 0.0
        %1509 = vmatprep.subr.mxu0 0.0
        %1510 = vmatpush1.msra.mxu0 0.0
        %1511 = vmatprep.subr.mxu0 0.0
        %1512 = vmatpush1.msra.mxu0 0.0
        %1513 = vmatprep.subr.mxu0 0.0
        %1514 = vmatpush1.msra.mxu0 0.0
        %1515 = vmatprep.subr.mxu0 0.0
        %1516 = vmatpush1.msra.mxu0 0.0
        %1517 = vmatprep.subr.mxu0 0.0
        %1518 = vmatpush1.msra.mxu0 0.0
        %1519 = vmatprep.subr.mxu0 0.0
        %1520 = vmatpush1.msra.mxu0 0.0
        %1521 = vmatprep.subr.mxu0 0.0
        %1522 = vmatpush1.msra.mxu0 0.0
        %1523 = vmatprep.subr.mxu0 0.0
        %1524 = vmatpush1.msra.mxu0 0.0
        %1525 = vmatprep.subr.mxu0 0.0
        %1526 = vmatpush1.msra.mxu0 0.0
        %1527 = vmatprep.subr.mxu0 0.0
        %1528 = vmatpush1.msra.mxu0 0.0
        %1529 = vmatprep.subr.mxu0 0.0
        %1530 = vmatpush1.msra.mxu0 0.0
        %1531 = vmatprep.subr.mxu0 0.0
        %1532 = vmatpush1.msra.mxu0 0.0
        %1533 = vmatprep.subr.mxu0 0.0
        %1534 = vmatpush1.msra.mxu0 0.0
        %1535 = vmatprep.subr.mxu0 0.0
        %1536 = vmatpush1.msra.mxu0 0.0
        %1537 = vmatprep.subr.mxu0 0.0
        %1538 = vmatpush1.msra.mxu0 0.0
        %1539 = vmatprep.mubr.f32.mxu0 0.0
        %1540 = vmatmul.mubr.f32.gmra.mrb[0].mxu0 %v1467
        %v1541 = vpop.f32.mrb[0].mxu0
        %v1542 = vadd.f32 0.0, %v1541
        %v1543 = vpop.f32.mrb[0].mxu0
        %1544 = vmatprep.mubr.f32.mxu0 0.0
        %1545 = vmatmul.mubr.f32.gmra.mrb[0].mxu0 %v1470
        %v1546 = vpop.f32.mrb[0].mxu0
        %v1547 = vadd.f32 0.0, %v1546
        %v1548 = vpop.f32.mrb[0].mxu0
        %1549 = vmatprep.mubr.f32.mxu0 0.0
        %1550 = vmatmul.mubr.f32.gmra.mrb[0].mxu0 %v1473
        %v1551 = vpop.f32.mrb[0].mxu0
        %v1552 = vadd.f32 0.0, %v1551
        %v1553 = vpop.f32.mrb[0].mxu0
        %1554 = vdwg.mxu0
        %1555 = vrot.lane.b32.xlu0 %v834, 104
        %v1556 = vpop.permute.xlu0 %1555
        %1557 = vrot.lane.b32.xlu0 %v839, 104
        %v1558 = vpop.permute.xlu0 %1557
        %1559 = vrot.lane.b32.xlu0 %v844, 104
        %v1560 = vpop.permute.xlu0 %1559
        %1561 = vrot.lane.b32.xlu0 %v834, 72
        %v1562 = vpop.permute.xlu0 %1561
        %1563 = vrot.lane.b32.xlu0 %v839, 72
        %v1564 = vpop.permute.xlu0 %1563
        %1565 = vrot.lane.b32.xlu0 %v844, 72
        %v1566 = vpop.permute.xlu0 %1565
        %v1567 = vsel %vm860, %v1556, 0
        %v1569 = vsel %vm860, %v1558, 0
        %v1571 = vsel %vm860, %v1560, 0
        %v1573 = vsel %vm860, %v1562, 0
        %v1575 = vsel %vm860, %v1564, 0
        %v1577 = vsel %vm860, %v1566, 0
        %1579 = vmatprep.subr.mxu0 0.0
        %1580 = vmatpush1.xpose.msra.mxu0 %v1573
        %1581 = vmatprep.subr.mxu0 0.0
        %1582 = vmatpush1.xpose.msra.mxu0 %v1575
        %1583 = vmatprep.subr.mxu0 0.0
        %1584 = vmatpush1.xpose.msra.mxu0 %v1577
        %1585 = vmatprep.subr.mxu0 0.0
        %1586 = vmatpush1.xpose.msra.mxu0 0.0
        %1587 = vmatprep.subr.mxu0 0.0
        %1588 = vmatpush1.xpose.msra.mxu0 0.0
        %1589 = vmatprep.subr.mxu0 0.0
        %1590 = vmatpush1.xpose.msra.mxu0 0.0
        %1591 = vmatprep.subr.mxu0 0.0
        %1592 = vmatpush1.xpose.msra.mxu0 0.0
        %1593 = vmatprep.subr.mxu0 0.0
        %1594 = vmatpush1.xpose.msra.mxu0 0.0
        %1595 = vmatprep.subr.mxu0 0.0
        %1596 = vmatpush1.xpose.msra.mxu0 0.0
        %1597 = vmatprep.subr.mxu0 0.0
        %1598 = vmatpush1.xpose.msra.mxu0 0.0
        %1599 = vmatprep.subr.mxu0 0.0
        %1600 = vmatpush1.xpose.msra.mxu0 0.0
        %1601 = vmatprep.subr.mxu0 0.0
        %1602 = vmatpush1.xpose.msra.mxu0 0.0
        %1603 = vmatprep.subr.mxu0 0.0
        %1604 = vmatpush1.xpose.msra.mxu0 0.0
        %1605 = vmatprep.subr.mxu0 0.0
        %1606 = vmatpush1.xpose.msra.mxu0 0.0
        %1607 = vmatprep.subr.mxu0 0.0
        %1608 = vmatpush1.xpose.msra.mxu0 0.0
        %1609 = vmatprep.subr.mxu0 0.0
        %1610 = vmatpush1.xpose.msra.mxu0 0.0
        %1611 = vmatprep.subr.mxu0 0.0
        %1612 = vmatpush1.xpose.msra.mxu0 0.0
        %1613 = vmatprep.subr.mxu0 0.0
        %1614 = vmatpush1.xpose.msra.mxu0 0.0
        %1615 = vmatprep.subr.mxu0 0.0
        %1616 = vmatpush1.xpose.msra.mxu0 0.0
        %1617 = vmatprep.subr.mxu0 0.0
        %1618 = vmatpush1.xpose.msra.mxu0 0.0
        %1619 = vmatprep.subr.mxu0 0.0
        %1620 = vmatpush1.xpose.msra.mxu0 0.0
        %1621 = vmatprep.subr.mxu0 0.0
        %1622 = vmatpush1.xpose.msra.mxu0 0.0
        %1623 = vmatprep.subr.mxu0 0.0
        %1624 = vmatpush1.xpose.msra.mxu0 0.0
        %1625 = vmatprep.subr.mxu0 0.0
        %1626 = vmatpush1.xpose.msra.mxu0 0.0
        %1627 = vmatprep.subr.mxu0 0.0
        %1628 = vmatpush1.xpose.msra.mxu0 0.0
        %1629 = vmatprep.subr.mxu0 0.0
        %1630 = vmatpush1.xpose.msra.mxu0 0.0
        %1631 = vmatprep.subr.mxu0 0.0
        %1632 = vmatpush1.xpose.msra.mxu0 0.0
        %1633 = vmatprep.subr.mxu0 0.0
        %1634 = vmatpush1.xpose.msra.mxu0 0.0
        %1635 = vmatprep.subr.mxu0 0.0
        %1636 = vmatpush1.xpose.msra.mxu0 0.0
        %1637 = vmatprep.subr.mxu0 0.0
        %1638 = vmatpush1.xpose.msra.mxu0 0.0
        %1639 = vmatprep.subr.mxu0 0.0
        %1640 = vmatpush1.xpose.msra.mxu0 0.0
        %1641 = vmatprep.subr.mxu0 0.0
        %1642 = vmatpush1.xpose.msra.mxu0 0.0
        %1643 = vmatprep.mubr.f32.mxu0 0.0
        %1644 = vmatmul.mubr.f32.gmra.mrb[0].mxu0 %v1567
        %v1645 = vpop.f32.mrb[0].mxu0
        %v1646 = vadd.f32 %v850, %v1645
        %v1647 = vpop.f32.mrb[0].mxu0
        %1648 = vmatprep.mubr.f32.mxu0 0.0
        %1649 = vmatmul.mubr.f32.gmra.mrb[0].mxu0 %v1569
        %v1650 = vpop.f32.mrb[0].mxu0
        %v1651 = vadd.f32 %v850, %v1650
        %v1652 = vpop.f32.mrb[0].mxu0
        %1653 = vmatprep.mubr.f32.mxu0 0.0
        %1654 = vmatmul.mubr.f32.gmra.mrb[0].mxu0 %v1571
        %v1655 = vpop.f32.mrb[0].mxu0
        %v1656 = vadd.f32 %v850, %v1655
        %v1657 = vpop.f32.mrb[0].mxu0
        %1658 = vdwg.mxu0
        %v1659 = vsel %vm953, %v1646, -inf
        %1660 = vmax.xlane.f32.xlu0 %v1659
        %v1661 = vpop.xlane.xlu0 %1660
        %v1662 = vsel %vm953, %v1651, -inf
        %1663 = vmax.xlane.f32.xlu0 %v1662
        %v1664 = vpop.xlane.xlu0 %1663
        %v1665 = vsel %vm953, %v1656, -inf
        %1666 = vmax.xlane.f32.xlu0 %v1665
        %v1667 = vpop.xlane.xlu0 %1666
        %v1668 = vsub.f32 %v1646, %v1661
        %v1669 = vsub.f32 %v1651, %v1664
        %v1670 = vsub.f32 %v1656, %v1667
        %v1671 = vmul.f32 %v1668, 1.442695
        %v1672 = vpow.pop %v1671
        %v1673 = vmul.f32 %v1669, 1.442695
        %v1674 = vpow.pop %v1673
        %v1675 = vmul.f32 %v1670, 1.442695
        %v1676 = vpow.pop %v1675
        %v1677 = vsel %vm953, %v1672, 0.0
        %1678 = vadd.xlane.f32.xlu0 %v1677
        %v1679 = vpop.xlane.xlu0 %1678
        %v1680 = vsel %vm953, %v1674, 0.0
        %1681 = vadd.xlane.f32.xlu0 %v1680
        %v1682 = vpop.xlane.xlu0 %1681
        %v1683 = vsel %vm953, %v1676, 0.0
        %1684 = vadd.xlane.f32.xlu0 %v1683
        %v1685 = vpop.xlane.xlu0 %1684
        %v1686 = vrcp.pop %v1679
        %v1687 = vmul.f32 %v1672, %v1686
        %v1688 = vrcp.pop %v1682
        %v1689 = vmul.f32 %v1674, %v1688
        %v1690 = vrcp.pop %v1685
        %v1691 = vmul.f32 %v1676, %v1690
        %1692 = vrot.lane.b32.xlu0 %v834, 40
        %v1693 = vpop.permute.xlu0 %1692
        %1694 = vrot.lane.b32.xlu0 %v839, 40
        %v1695 = vpop.permute.xlu0 %1694
        %1696 = vrot.lane.b32.xlu0 %v844, 40
        %v1697 = vpop.permute.xlu0 %1696
        %v1702 = vsel %vm953, %v1687, 0
        %v1705 = vsel %vm953, %v1689, 0
        %v1708 = vsel %vm953, %v1691, 0
        %1710 = vmatprep.subr.mxu0 0.0
        %1711 = vmatpush1.msra.mxu0 %v1693
        %1712 = vmatprep.subr.mxu0 0.0
        %1713 = vmatpush1.msra.mxu0 %v1695
        %1714 = vmatprep.subr.mxu0 0.0
        %1715 = vmatpush1.msra.mxu0 %v1697
        %1716 = vmatprep.subr.mxu0 0.0
        %1717 = vmatpush1.msra.mxu0 0.0
        %1718 = vmatprep.subr.mxu0 0.0
        %1719 = vmatpush1.msra.mxu0 0.0
        %1720 = vmatprep.subr.mxu0 0.0
        %1721 = vmatpush1.msra.mxu0 0.0
        %1722 = vmatprep.subr.mxu0 0.0
        %1723 = vmatpush1.msra.mxu0 0.0
        %1724 = vmatprep.subr.mxu0 0.0
        %1725 = vmatpush1.msra.mxu0 0.0
        %1726 = vmatprep.subr.mxu0 0.0
        %1727 = vmatpush1.msra.mxu0 0.0
        %1728 = vmatprep.subr.mxu0 0.0
        %1729 = vmatpush1.msra.mxu0 0.0
        %1730 = vmatprep.subr.mxu0 0.0
        %1731 = vmatpush1.msra.mxu0 0.0
        %1732 = vmatprep.subr.mxu0 0.0
        %1733 = vmatpush1.msra.mxu0 0.0
        %1734 = vmatprep.subr.mxu0 0.0
        %1735 = vmatpush1.msra.mxu0 0.0
        %1736 = vmatprep.subr.mxu0 0.0
        %1737 = vmatpush1.msra.mxu0 0.0
        %1738 = vmatprep.subr.mxu0 0.0
        %1739 = vmatpush1.msra.mxu0 0.0
        %1740 = vmatprep.subr.mxu0 0.0
        %1741 = vmatpush1.msra.mxu0 0.0
        %1742 = vmatprep.subr.mxu0 0.0
        %1743 = vmatpush1.msra.mxu0 0.0
        %1744 = vmatprep.subr.mxu0 0.0
        %1745 = vmatpush1.msra.mxu0 0.0
        %1746 = vmatprep.subr.mxu0 0.0
        %1747 = vmatpush1.msra.mxu0 0.0
        %1748 = vmatprep.subr.mxu0 0.0
        %1749 = vmatpush1.msra.mxu0 0.0
        %1750 = vmatprep.subr.mxu0 0.0
        %1751 = vmatpush1.msra.mxu0 0.0
        %1752 = vmatprep.subr.mxu0 0.0
        %1753 = vmatpush1.msra.mxu0 0.0
        %1754 = vmatprep.subr.mxu0 0.0
        %1755 = vmatpush1.msra.mxu0 0.0
        %1756 = vmatprep.subr.mxu0 0.0
        %1757 = vmatpush1.msra.mxu0 0.0
        %1758 = vmatprep.subr.mxu0 0.0
        %1759 = vmatpush1.msra.mxu0 0.0
        %1760 = vmatprep.subr.mxu0 0.0
        %1761 = vmatpush1.msra.mxu0 0.0
        %1762 = vmatprep.subr.mxu0 0.0
        %1763 = vmatpush1.msra.mxu0 0.0
        %1764 = vmatprep.subr.mxu0 0.0
        %1765 = vmatpush1.msra.mxu0 0.0
        %1766 = vmatprep.subr.mxu0 0.0
        %1767 = vmatpush1.msra.mxu0 0.0
        %1768 = vmatprep.subr.mxu0 0.0
        %1769 = vmatpush1.msra.mxu0 0.0
        %1770 = vmatprep.subr.mxu0 0.0
        %1771 = vmatpush1.msra.mxu0 0.0
        %1772 = vmatprep.subr.mxu0 0.0
        %1773 = vmatpush1.msra.mxu0 0.0
        %1774 = vmatprep.mubr.f32.mxu0 0.0
        %1775 = vmatmul.mubr.f32.gmra.mrb[0].mxu0 %v1702
        %v1776 = vpop.f32.mrb[0].mxu0
        %v1777 = vadd.f32 0.0, %v1776
        %v1778 = vpop.f32.mrb[0].mxu0
        %1779 = vmatprep.mubr.f32.mxu0 0.0
        %1780 = vmatmul.mubr.f32.gmra.mrb[0].mxu0 %v1705
        %v1781 = vpop.f32.mrb[0].mxu0
        %v1782 = vadd.f32 0.0, %v1781
        %v1783 = vpop.f32.mrb[0].mxu0
        %1784 = vmatprep.mubr.f32.mxu0 0.0
        %1785 = vmatmul.mubr.f32.gmra.mrb[0].mxu0 %v1708
        %v1786 = vpop.f32.mrb[0].mxu0
        %v1787 = vadd.f32 0.0, %v1786
        %v1788 = vpop.f32.mrb[0].mxu0
        %1789 = vdwg.mxu0
        %1793 = vrot.lane.b32.xlu0 %v1307, 8
        %v1794 = vpop.permute.xlu0 %1793
        %1795 = vrot.lane.b32.xlu0 %v1312, 8
        %v1796 = vpop.permute.xlu0 %1795
        %1797 = vrot.lane.b32.xlu0 %v1317, 8
        %v1798 = vpop.permute.xlu0 %1797
        %1805 = vrot.lane.b32.xlu0 %v1542, 16
        %v1806 = vpop.permute.xlu0 %1805
        %1807 = vrot.lane.b32.xlu0 %v1547, 16
        %v1808 = vpop.permute.xlu0 %1807
        %1809 = vrot.lane.b32.xlu0 %v1552, 16
        %v1810 = vpop.permute.xlu0 %1809
        %1817 = vrot.lane.b32.xlu0 %v1777, 24
        %v1818 = vpop.permute.xlu0 %1817
        %1819 = vrot.lane.b32.xlu0 %v1782, 24
        %v1820 = vpop.permute.xlu0 %1819
        %1821 = vrot.lane.b32.xlu0 %v1787, 24
        %v1822 = vpop.permute.xlu0 %1821
        %v1826 = vsel %vm860, %v1072, %v1794
        %v1827 = vsel %vm860, %v1077, %v1796
        %v1828 = vsel %vm860, %v1082, %v1798
        %vm1829 = vcmask 130048
        %v1830 = vsel %vm1829, %v1826, %v1806
        %v1831 = vsel %vm1829, %v1827, %v1808
        %v1832 = vsel %vm1829, %v1828, %v1810
        %v1833 = vsel %vm953, %v1830, %v1818
        %v1834 = vsel %vm953, %v1831, %v1820
        %v1835 = vsel %vm953, %v1832, %v1822
        %v1836 = vld [vmem:[%s563] sm:$0xff]
        %v1837 = vld [vmem:[%s563 + $0x8] sm:$0xff]
        %v1838 = vld [vmem:[%s563 + $0x10] sm:$0xff]
        %v1839 = vld [vmem:[%s563 + $0x18] sm:$0xff]
        %v1841 = vsel %vm695, %v1833, 0
        %v1844 = vsel %vm695, %v1834, 0
        %v1847 = vsel %vm695, %v1835, 0
        %1849 = vmatprep.subr.mxu0 0.0
        %1850 = vmatpush1.msra.mxu0 %v1836
        %1851 = vmatprep.subr.mxu0 0.0
        %1852 = vmatpush1.msra.mxu0 %v1837
        %1853 = vmatprep.subr.mxu0 0.0
        %1854 = vmatpush1.msra.mxu0 %v1838
        %1855 = vmatprep.subr.mxu0 0.0
        %1856 = vmatpush1.msra.mxu0 %v1839
        %1857 = vmatprep.subr.mxu0 0.0
        %1858 = vmatpush1.msra.mxu0 0.0
        %1859 = vmatprep.subr.mxu0 0.0
        %1860 = vmatpush1.msra.mxu0 0.0
        %1861 = vmatprep.subr.mxu0 0.0
        %1862 = vmatpush1.msra.mxu0 0.0
        %1863 = vmatprep.subr.mxu0 0.0
        %1864 = vmatpush1.msra.mxu0 0.0
        %1865 = vmatprep.subr.mxu0 0.0
        %1866 = vmatpush1.msra.mxu0 0.0
        %1867 = vmatprep.subr.mxu0 0.0
        %1868 = vmatpush1.msra.mxu0 0.0
        %1869 = vmatprep.subr.mxu0 0.0
        %1870 = vmatpush1.msra.mxu0 0.0
        %1871 = vmatprep.subr.mxu0 0.0
        %1872 = vmatpush1.msra.mxu0 0.0
        %1873 = vmatprep.subr.mxu0 0.0
        %1874 = vmatpush1.msra.mxu0 0.0
        %1875 = vmatprep.subr.mxu0 0.0
        %1876 = vmatpush1.msra.mxu0 0.0
        %1877 = vmatprep.subr.mxu0 0.0
        %1878 = vmatpush1.msra.mxu0 0.0
        %1879 = vmatprep.subr.mxu0 0.0
        %1880 = vmatpush1.msra.mxu0 0.0
        %1881 = vmatprep.subr.mxu0 0.0
        %1882 = vmatpush1.msra.mxu0 0.0
        %1883 = vmatprep.subr.mxu0 0.0
        %1884 = vmatpush1.msra.mxu0 0.0
        %1885 = vmatprep.subr.mxu0 0.0
        %1886 = vmatpush1.msra.mxu0 0.0
        %1887 = vmatprep.subr.mxu0 0.0
        %1888 = vmatpush1.msra.mxu0 0.0
        %1889 = vmatprep.subr.mxu0 0.0
        %1890 = vmatpush1.msra.mxu0 0.0
        %1891 = vmatprep.subr.mxu0 0.0
        %1892 = vmatpush1.msra.mxu0 0.0
        %1893 = vmatprep.subr.mxu0 0.0
        %1894 = vmatpush1.msra.mxu0 0.0
        %1895 = vmatprep.subr.mxu0 0.0
        %1896 = vmatpush1.msra.mxu0 0.0
        %1897 = vmatprep.subr.mxu0 0.0
        %1898 = vmatpush1.msra.mxu0 0.0
        %1899 = vmatprep.subr.mxu0 0.0
        %1900 = vmatpush1.msra.mxu0 0.0
        %1901 = vmatprep.subr.mxu0 0.0
        %1902 = vmatpush1.msra.mxu0 0.0
        %1903 = vmatprep.subr.mxu0 0.0
        %1904 = vmatpush1.msra.mxu0 0.0
        %1905 = vmatprep.subr.mxu0 0.0
        %1906 = vmatpush1.msra.mxu0 0.0
        %1907 = vmatprep.subr.mxu0 0.0
        %1908 = vmatpush1.msra.mxu0 0.0
        %1909 = vmatprep.subr.mxu0 0.0
        %1910 = vmatpush1.msra.mxu0 0.0
        %1911 = vmatprep.subr.mxu0 0.0
        %1912 = vmatpush1.msra.mxu0 0.0
        %1913 = vmatprep.mubr.f32.mxu0 0.0
        %1914 = vmatmul.mubr.f32.gmra.mrb[0].mxu0 %v1841
        %v1915 = vpop.f32.mrb[0].mxu0
        %v1916 = vadd.f32 0.0, %v1915
        %v1917 = vpop.f32.mrb[0].mxu0
        %1918 = vmatprep.mubr.f32.mxu0 0.0
        %1919 = vmatmul.mubr.f32.gmra.mrb[0].mxu0 %v1844
        %v1920 = vpop.f32.mrb[0].mxu0
        %v1921 = vadd.f32 0.0, %v1920
        %v1922 = vpop.f32.mrb[0].mxu0
        %1923 = vmatprep.mubr.f32.mxu0 0.0
        %1924 = vmatmul.mubr.f32.gmra.mrb[0].mxu0 %v1847
        %v1925 = vpop.f32.mrb[0].mxu0
        %v1926 = vadd.f32 0.0, %v1925
        %v1927 = vpop.f32.mrb[0].mxu0
        %1928 = vdwg.mxu0
        %v1929 = vadd.f32 %v692, %v1916
        %v1930 = vadd.f32 %v693, %v1921
        %v1931 = vadd.f32 %v694, %v1926
        %v1932 = vlaneseq
        %v1933 = vshrl.u32 %v1932, 7
        %v1934 = vsub.s32 4, %v1933
        %v1935 = vrot.slane %v691, %v1934
        %v1936 = vadd.f32 %v1929, %v1935
        %v1937 = vadd.f32 %v1930, %v1935
        %v1938 = vadd.f32 %v1931, %v1935
        %v1939 = vsel %vm695, %v1936, 0.0
        %1940 = vadd.xlane.f32.xlu0 %v1939
        %v1941 = vpop.xlane.xlu0 %1940
        %v1942 = vsel %vm695, %v1937, 0.0
        %1943 = vadd.xlane.f32.xlu0 %v1942
        %v1944 = vpop.xlane.xlu0 %1943
        %v1945 = vsel %vm695, %v1938, 0.0
        %1946 = vadd.xlane.f32.xlu0 %v1945
        %v1947 = vpop.xlane.xlu0 %1946
        %v1948 = vmul.f32 %v1941, %v705
        %v1949 = vmul.f32 %v1944, %v705
        %v1950 = vmul.f32 %v1947, %v705
        %v1951 = vsub.f32 %v1936, %v1948
        %v1952 = vsub.f32 %v1937, %v1949
        %v1953 = vsub.f32 %v1938, %v1950
        %v1954 = vmul.f32 %v1951, %v1951
        %v1955 = vmul.f32 %v1952, %v1952
        %v1956 = vmul.f32 %v1953, %v1953
        %v1957 = vsel %vm695, %v1954, 0.0
        %1958 = vadd.xlane.f32.xlu0 %v1957
        %v1959 = vpop.xlane.xlu0 %1958
        %v1960 = vsel %vm695, %v1955, 0.0
        %1961 = vadd.xlane.f32.xlu0 %v1960
        %v1962 = vpop.xlane.xlu0 %1961
        %v1963 = vsel %vm695, %v1956, 0.0
        %1964 = vadd.xlane.f32.xlu0 %v1963
        %v1965 = vpop.xlane.xlu0 %1964
        %v1966 = vmul.f32 %v1959, %v705
        %v1967 = vmul.f32 %v1962, %v705
        %v1968 = vmul.f32 %v1965, %v705
        %v1969 = vadd.f32 %v1966, 1e-05
        %v1970 = vadd.f32 %v1967, 1e-05
        %v1971 = vadd.f32 %v1968, 1e-05
        %v1972 = vrsqrt.pop %v1969
        %v1973 = vrsqrt.pop %v1970
        %v1974 = vrsqrt.pop %v1971
        %v1975 = vmul.f32 %v1951, %v1972
        %v1976 = vmul.f32 %v1952, %v1973
        %v1977 = vmul.f32 %v1953, %v1974
        %v1978 = vlaneseq
        %v1979 = vshrl.u32 %v1978, 7
        %v1980 = vsub.s32 2, %v1979
        %v1981 = vrot.slane %v691, %v1980
        %v1982 = vmul.f32 %v1975, %v1981
        %v1983 = vmul.f32 %v1976, %v1981
        %v1984 = vmul.f32 %v1977, %v1981
        %v1985 = vlaneseq
        %v1986 = vshrl.u32 %v1985, 7
        %v1987 = vsub.s32 3, %v1986
        %v1988 = vrot.slane %v691, %v1987
        %v1989 = vadd.f32 %v1982, %v1988
        %v1990 = vadd.f32 %v1983, %v1988
        %v1991 = vadd.f32 %v1984, %v1988
        %v1992 = vld [vmem:[%s568] sm:$0xff]
        %v1993 = vld [vmem:[%s568 + $0x8] sm:$0xff]
        %v1994 = vld [vmem:[%s568 + $0x10] sm:$0xff]
        %v1995 = vld [vmem:[%s568 + $0x18] sm:$0xff]
        %v1996 = vlaneseq
        %v1997 = vshrl.u32 %v1996, 7
        %v1998 = vsub.s32 7, %v1997
        %v1999 = vrot.slane %v691, %v1998
        %v2001 = vsel %vm695, %v1989, 0
        %v2004 = vsel %vm695, %v1990, 0
        %v2007 = vsel %vm695, %v1991, 0
        %2009 = vmatprep.subr.mxu0 0.0
        %2010 = vmatpush1.msra.mxu0 %v1992
        %2011 = vmatprep.subr.mxu0 0.0
        %2012 = vmatpush1.msra.mxu0 %v1993
        %2013 = vmatprep.subr.mxu0 0.0
        %2014 = vmatpush1.msra.mxu0 %v1994
        %2015 = vmatprep.subr.mxu0 0.0
        %2016 = vmatpush1.msra.mxu0 %v1995
        %2017 = vmatprep.subr.mxu0 0.0
        %2018 = vmatpush1.msra.mxu0 0.0
        %2019 = vmatprep.subr.mxu0 0.0
        %2020 = vmatpush1.msra.mxu0 0.0
        %2021 = vmatprep.subr.mxu0 0.0
        %2022 = vmatpush1.msra.mxu0 0.0
        %2023 = vmatprep.subr.mxu0 0.0
        %2024 = vmatpush1.msra.mxu0 0.0
        %2025 = vmatprep.subr.mxu0 0.0
        %2026 = vmatpush1.msra.mxu0 0.0
        %2027 = vmatprep.subr.mxu0 0.0
        %2028 = vmatpush1.msra.mxu0 0.0
        %2029 = vmatprep.subr.mxu0 0.0
        %2030 = vmatpush1.msra.mxu0 0.0
        %2031 = vmatprep.subr.mxu0 0.0
        %2032 = vmatpush1.msra.mxu0 0.0
        %2033 = vmatprep.subr.mxu0 0.0
        %2034 = vmatpush1.msra.mxu0 0.0
        %2035 = vmatprep.subr.mxu0 0.0
        %2036 = vmatpush1.msra.mxu0 0.0
        %2037 = vmatprep.subr.mxu0 0.0
        %2038 = vmatpush1.msra.mxu0 0.0
        %2039 = vmatprep.subr.mxu0 0.0
        %2040 = vmatpush1.msra.mxu0 0.0
        %2041 = vmatprep.subr.mxu0 0.0
        %2042 = vmatpush1.msra.mxu0 0.0
        %2043 = vmatprep.subr.mxu0 0.0
        %2044 = vmatpush1.msra.mxu0 0.0
        %2045 = vmatprep.subr.mxu0 0.0
        %2046 = vmatpush1.msra.mxu0 0.0
        %2047 = vmatprep.subr.mxu0 0.0
        %2048 = vmatpush1.msra.mxu0 0.0
        %2049 = vmatprep.subr.mxu0 0.0
        %2050 = vmatpush1.msra.mxu0 0.0
        %2051 = vmatprep.subr.mxu0 0.0
        %2052 = vmatpush1.msra.mxu0 0.0
        %2053 = vmatprep.subr.mxu0 0.0
        %2054 = vmatpush1.msra.mxu0 0.0
        %2055 = vmatprep.subr.mxu0 0.0
        %2056 = vmatpush1.msra.mxu0 0.0
        %2057 = vmatprep.subr.mxu0 0.0
        %2058 = vmatpush1.msra.mxu0 0.0
        %2059 = vmatprep.subr.mxu0 0.0
        %2060 = vmatpush1.msra.mxu0 0.0
        %2061 = vmatprep.subr.mxu0 0.0
        %2062 = vmatpush1.msra.mxu0 0.0
        %2063 = vmatprep.subr.mxu0 0.0
        %2064 = vmatpush1.msra.mxu0 0.0
        %2065 = vmatprep.subr.mxu0 0.0
        %2066 = vmatpush1.msra.mxu0 0.0
        %2067 = vmatprep.subr.mxu0 0.0
        %2068 = vmatpush1.msra.mxu0 0.0
        %2069 = vmatprep.subr.mxu0 0.0
        %2070 = vmatpush1.msra.mxu0 0.0
        %2071 = vmatprep.subr.mxu0 0.0
        %2072 = vmatpush1.msra.mxu0 0.0
        %2073 = vmatprep.mubr.f32.mxu0 0.0
        %2074 = vmatmul.mubr.f32.gmra.mrb[0].mxu0 %v2001
        %v2075 = vpop.f32.mrb[0].mxu0
        %v2076 = vadd.f32 %v1999, %v2075
        %v2077 = vpop.f32.mrb[0].mxu0
        %2078 = vmatprep.mubr.f32.mxu0 0.0
        %2079 = vmatmul.mubr.f32.gmra.mrb[0].mxu0 %v2004
        %v2080 = vpop.f32.mrb[0].mxu0
        %v2081 = vadd.f32 %v1999, %v2080
        %v2082 = vpop.f32.mrb[0].mxu0
        %2083 = vmatprep.mubr.f32.mxu0 0.0
        %2084 = vmatmul.mubr.f32.gmra.mrb[0].mxu0 %v2007
        %v2085 = vpop.f32.mrb[0].mxu0
        %v2086 = vadd.f32 %v1999, %v2085
        %v2087 = vpop.f32.mrb[0].mxu0
        %2088 = vdwg.mxu0
        %v2089 = vmul.f32 %v2076, 0.5
        %v2090 = vmul.f32 %v2081, 0.5
        %v2091 = vmul.f32 %v2086, 0.5
        %v2092 = vmul.f32 %v2076, 0.70710677
        %v2093 = vmul.f32 %v2081, 0.70710677
        %v2094 = vmul.f32 %v2086, 0.70710677
        %vm2095 = vcmp.lt.f32.partialorder %v2092, 0.0
        %vm2096 = vcmp.lt.f32.partialorder %v2093, 0.0
        %vm2097 = vcmp.lt.f32.partialorder %v2094, 0.0
        %v2098 = vsel %vm2095, -1.0, 1.0
        %v2099 = vsel %vm2096, -1.0, 1.0
        %v2100 = vsel %vm2097, -1.0, 1.0
        %v2101 = vand.u32 2147483647, %v2092
        %v2102 = vand.u32 2147483647, %v2093
        %v2103 = vand.u32 2147483647, %v2094
        %v2104 = vmul.f32 %v2101, 0.3275911
        %v2105 = vmul.f32 %v2102, 0.3275911
        %v2106 = vmul.f32 %v2103, 0.3275911
        %v2107 = vadd.f32 %v2104, 1.0
        %v2108 = vadd.f32 %v2105, 1.0
        %v2109 = vadd.f32 %v2106, 1.0
        %v2110 = vrcp.pop %v2107
        %v2111 = vmul.f32 1.0, %v2110
        %v2112 = vrcp.pop %v2108
        %v2113 = vmul.f32 1.0, %v2112
        %v2114 = vrcp.pop %v2109
        %v2115 = vmul.f32 1.0, %v2114
        %v2116 = vmul.f32 %v2111, 1.0614054
        %v2117 = vmul.f32 %v2113, 1.0614054
        %v2118 = vmul.f32 %v2115, 1.0614054
        %v2119 = vadd.f32 %v2116, -1.4531521
        %v2120 = vadd.f32 %v2117, -1.4531521
        %v2121 = vadd.f32 %v2118, -1.4531521
        %v2122 = vmul.f32 %v2119, %v2111
        %v2123 = vmul.f32 %v2120, %v2113
        %v2124 = vmul.f32 %v2121, %v2115
        %v2125 = vadd.f32 %v2122, 1.4214138
        %v2126 = vadd.f32 %v2123, 1.4214138
        %v2127 = vadd.f32 %v2124, 1.4214138
        %v2128 = vmul.f32 %v2125, %v2111
        %v2129 = vmul.f32 %v2126, %v2113
        %v2130 = vmul.f32 %v2127, %v2115
        %v2131 = vadd.f32 %v2128, -0.28449672
        %v2132 = vadd.f32 %v2129, -0.28449672
        %v2133 = vadd.f32 %v2130, -0.28449672
        %v2134 = vmul.f32 %v2131, %v2111
        %v2135 = vmul.f32 %v2132, %v2113
        %v2136 = vmul.f32 %v2133, %v2115
        %v2137 = vadd.f32 %v2134, 0.2548296
        %v2138 = vadd.f32 %v2135, 0.2548296
        %v2139 = vadd.f32 %v2136, 0.2548296
        %v2140 = vmul.f32 %v2137, %v2111
        %v2141 = vmul.f32 %v2138, %v2113
        %v2142 = vmul.f32 %v2139, %v2115
        %v2143 = vmul.f32 %v2101, %v2101
        %v2144 = vmul.f32 %v2102, %v2102
        %v2145 = vmul.f32 %v2103, %v2103
        %v2146 = vsub.f32 0.0, %v2143
        %v2147 = vsub.f32 0.0, %v2144
        %v2148 = vsub.f32 0.0, %v2145
        %v2149 = vmul.f32 %v2146, 1.442695
        %v2150 = vpow.pop %v2149
        %v2151 = vmul.f32 %v2147, 1.442695
        %v2152 = vpow.pop %v2151
        %v2153 = vmul.f32 %v2148, 1.442695
        %v2154 = vpow.pop %v2153
        %v2155 = vmul.f32 %v2140, %v2150
        %v2156 = vmul.f32 %v2141, %v2152
        %v2157 = vmul.f32 %v2142, %v2154
        %v2158 = vsub.f32 1.0, %v2155
        %v2159 = vsub.f32 1.0, %v2156
        %v2160 = vsub.f32 1.0, %v2157
        %v2161 = vmul.f32 %v2098, %v2158
        %v2162 = vmul.f32 %v2099, %v2159
        %v2163 = vmul.f32 %v2100, %v2160
        %v2164 = vadd.f32 %v2161, 1.0
        %v2165 = vadd.f32 %v2162, 1.0
        %v2166 = vadd.f32 %v2163, 1.0
        %v2167 = vmul.f32 %v2089, %v2164
        %v2168 = vmul.f32 %v2090, %v2165
        %v2169 = vmul.f32 %v2091, %v2166
        %v2170 = vld [vmem:[%s573] sm:$0xff]
        %v2171 = vld [vmem:[%s573 + $0x8] sm:$0xff]
        %v2172 = vld [vmem:[%s573 + $0x10] sm:$0xff]
        %v2173 = vld [vmem:[%s573 + $0x18] sm:$0xff]
        %v2174 = vld [vmem:[%s573 + $0x20] sm:$0xff]
        %v2175 = vld [vmem:[%s573 + $0x28] sm:$0xff]
        %v2176 = vld [vmem:[%s573 + $0x30] sm:$0xff]
        %v2177 = vld [vmem:[%s573 + $0x38] sm:$0xff]
        %vm2178 = vcmask 523264
        %v2180 = vsel %vm2178, %v2167, 0
        %v2183 = vsel %vm2178, %v2168, 0
        %v2186 = vsel %vm2178, %v2169, 0
        %2188 = vmatprep.subr.mxu0 0.0
        %2189 = vmatpush1.msra.mxu0 %v2170
        %2190 = vmatprep.subr.mxu0 0.0
        %2191 = vmatpush1.msra.mxu0 %v2171
        %2192 = vmatprep.subr.mxu0 0.0
        %2193 = vmatpush1.msra.mxu0 %v2172
        %2194 = vmatprep.subr.mxu0 0.0
        %2195 = vmatpush1.msra.mxu0 %v2173
        %2196 = vmatprep.subr.mxu0 0.0
        %2197 = vmatpush1.msra.mxu0 %v2174
        %2198 = vmatprep.subr.mxu0 0.0
        %2199 = vmatpush1.msra.mxu0 %v2175
        %2200 = vmatprep.subr.mxu0 0.0
        %2201 = vmatpush1.msra.mxu0 %v2176
        %2202 = vmatprep.subr.mxu0 0.0
        %2203 = vmatpush1.msra.mxu0 %v2177
        %2204 = vmatprep.subr.mxu0 0.0
        %2205 = vmatpush1.msra.mxu0 0.0
        %2206 = vmatprep.subr.mxu0 0.0
        %2207 = vmatpush1.msra.mxu0 0.0
        %2208 = vmatprep.subr.mxu0 0.0
        %2209 = vmatpush1.msra.mxu0 0.0
        %2210 = vmatprep.subr.mxu0 0.0
        %2211 = vmatpush1.msra.mxu0 0.0
        %2212 = vmatprep.subr.mxu0 0.0
        %2213 = vmatpush1.msra.mxu0 0.0
        %2214 = vmatprep.subr.mxu0 0.0
        %2215 = vmatpush1.msra.mxu0 0.0
        %2216 = vmatprep.subr.mxu0 0.0
        %2217 = vmatpush1.msra.mxu0 0.0
        %2218 = vmatprep.subr.mxu0 0.0
        %2219 = vmatpush1.msra.mxu0 0.0
        %2220 = vmatprep.subr.mxu0 0.0
        %2221 = vmatpush1.msra.mxu0 0.0
        %2222 = vmatprep.subr.mxu0 0.0
        %2223 = vmatpush1.msra.mxu0 0.0
        %2224 = vmatprep.subr.mxu0 0.0
        %2225 = vmatpush1.msra.mxu0 0.0
        %2226 = vmatprep.subr.mxu0 0.0
        %2227 = vmatpush1.msra.mxu0 0.0
        %2228 = vmatprep.subr.mxu0 0.0
        %2229 = vmatpush1.msra.mxu0 0.0
        %2230 = vmatprep.subr.mxu0 0.0
        %2231 = vmatpush1.msra.mxu0 0.0
        %2232 = vmatprep.subr.mxu0 0.0
        %2233 = vmatpush1.msra.mxu0 0.0
        %2234 = vmatprep.subr.mxu0 0.0
        %2235 = vmatpush1.msra.mxu0 0.0
        %2236 = vmatprep.subr.mxu0 0.0
        %2237 = vmatpush1.msra.mxu0 0.0
        %2238 = vmatprep.subr.mxu0 0.0
        %2239 = vmatpush1.msra.mxu0 0.0
        %2240 = vmatprep.subr.mxu0 0.0
        %2241 = vmatpush1.msra.mxu0 0.0
        %2242 = vmatprep.subr.mxu0 0.0
        %2243 = vmatpush1.msra.mxu0 0.0
        %2244 = vmatprep.subr.mxu0 0.0
        %2245 = vmatpush1.msra.mxu0 0.0
        %2246 = vmatprep.subr.mxu0 0.0
        %2247 = vmatpush1.msra.mxu0 0.0
        %2248 = vmatprep.subr.mxu0 0.0
        %2249 = vmatpush1.msra.mxu0 0.0
        %2250 = vmatprep.subr.mxu0 0.0
        %2251 = vmatpush1.msra.mxu0 0.0
        %2252 = vmatprep.mubr.f32.mxu0 0.0
        %2253 = vmatmul.mubr.f32.gmra.mrb[0].mxu0 %v2180
        %v2254 = vpop.f32.mrb[0].mxu0
        %v2255 = vadd.f32 0.0, %v2254
        %v2256 = vpop.f32.mrb[0].mxu0
        %2257 = vmatprep.mubr.f32.mxu0 0.0
        %2258 = vmatmul.mubr.f32.gmra.mrb[0].mxu0 %v2183
        %v2259 = vpop.f32.mrb[0].mxu0
        %v2260 = vadd.f32 0.0, %v2259
        %v2261 = vpop.f32.mrb[0].mxu0
        %2262 = vmatprep.mubr.f32.mxu0 0.0
        %2263 = vmatmul.mubr.f32.gmra.mrb[0].mxu0 %v2186
        %v2264 = vpop.f32.mrb[0].mxu0
        %v2265 = vadd.f32 0.0, %v2264
        %v2266 = vpop.f32.mrb[0].mxu0
        %2267 = vdwg.mxu0
        %v2268 = vadd.f32 %v1936, %v2255
        %v2269 = vadd.f32 %v1937, %v2260
        %v2270 = vadd.f32 %v1938, %v2265
        %v2271 = vlaneseq
        %v2272 = vshrl.u32 %v2271, 7
        %v2273 = vsub.s32 5, %v2272
        %v2274 = vrot.slane %v691, %v2273
        %v2275 = vadd.f32 %v2268, %v2274
        %v2276 = vadd.f32 %v2269, %v2274
        %v2277 = vadd.f32 %v2270, %v2274
        %2278 = vst.msk [vmem:[#allocation2] sm:$0xff] %vm695, %v2275
        %2279 = vst.msk [vmem:[#allocation2 + $0x8] sm:$0xff] %vm695, %v2276
        %2280 = vst.msk [vmem:[#allocation2 + $0x10] sm:$0xff] %vm695, %v2277
        %p2281 = scmp.eq.s32.totalorder %s33, 1
        // Predicated region
        $region81: #{vit_forward.1} parent=75 // pred_check
          %p2282 = pneg %p2281
        $region82: #{vit_forward.1} parent=75 // pred_check_branch
          %2284 = sbr.rel (%p2282) target = $region84
        $region83: #{vit_forward.1} parent=75 // pred_region
          %v2285 = vld [vmem:[%s10] sm:$0x1]
          %v2286 = vld [vmem:[%s11] sm:$0x1]
          %vm2287 = vcmask 253952
          %v2288 = vsel %vm2287, %v2275, 0.0
          %2289 = vadd.xlane.f32.xlu0 %v2288
          %v2290 = vpop.xlane.xlu0 %2289
          %v2291 = vmul.f32 %v2290, %v705
          %v2292 = vsub.f32 %v2275, %v2291
          %v2293 = vmul.f32 %v2292, %v2292
          %v2294 = vsel %vm2287, %v2293, 0.0
          %2295 = vadd.xlane.f32.xlu0 %v2294
          %v2296 = vpop.xlane.xlu0 %2295
          %v2297 = vmul.f32 %v2296, %v705
          %v2298 = vadd.f32 %v2297, 1e-05
          %v2299 = vrsqrt.pop %v2298
          %v2300 = vmul.f32 %v2292, %v2299
          %v2301 = vmul.f32 %v2300, %v2285
          %v2302 = vadd.f32 %v2301, %v2286
          %v2303 = vld [vmem:[%s12] sm:$0xff]
          %v2304 = vld [vmem:[%s12 + $0x8] sm:$0xff]
          %v2305 = vld [vmem:[%s12 + $0x10] sm:$0xff]
          %v2306 = vld [vmem:[%s12 + $0x18] sm:$0xff]
          %v2307 = vld [vmem:[%s13] sm:$0x1]
          %v2309 = vsel %vm695, %v2302, 0
          %2311 = vmatprep.subr.mxu0 0.0
          %2312 = vmatpush1.msra.mxu0 %v2303
          %2313 = vmatprep.subr.mxu0 0.0
          %2314 = vmatpush1.msra.mxu0 %v2304
          %2315 = vmatprep.subr.mxu0 0.0
          %2316 = vmatpush1.msra.mxu0 %v2305
          %2317 = vmatprep.subr.mxu0 0.0
          %2318 = vmatpush1.msra.mxu0 %v2306
          %2319 = vmatprep.subr.mxu0 0.0
          %2320 = vmatpush1.msra.mxu0 0.0
          %2321 = vmatprep.subr.mxu0 0.0
          %2322 = vmatpush1.msra.mxu0 0.0
          %2323 = vmatprep.subr.mxu0 0.0
          %2324 = vmatpush1.msra.mxu0 0.0
          %2325 = vmatprep.subr.mxu0 0.0
          %2326 = vmatpush1.msra.mxu0 0.0
          %2327 = vmatprep.subr.mxu0 0.0
          %2328 = vmatpush1.msra.mxu0 0.0
          %2329 = vmatprep.subr.mxu0 0.0
          %2330 = vmatpush1.msra.mxu0 0.0
          %2331 = vmatprep.subr.mxu0 0.0
          %2332 = vmatpush1.msra.mxu0 0.0
          %2333 = vmatprep.subr.mxu0 0.0
          %2334 = vmatpush1.msra.mxu0 0.0
          %2335 = vmatprep.subr.mxu0 0.0
          %2336 = vmatpush1.msra.mxu0 0.0
          %2337 = vmatprep.subr.mxu0 0.0
          %2338 = vmatpush1.msra.mxu0 0.0
          %2339 = vmatprep.subr.mxu0 0.0
          %2340 = vmatpush1.msra.mxu0 0.0
          %2341 = vmatprep.subr.mxu0 0.0
          %2342 = vmatpush1.msra.mxu0 0.0
          %2343 = vmatprep.subr.mxu0 0.0
          %2344 = vmatpush1.msra.mxu0 0.0
          %2345 = vmatprep.subr.mxu0 0.0
          %2346 = vmatpush1.msra.mxu0 0.0
          %2347 = vmatprep.subr.mxu0 0.0
          %2348 = vmatpush1.msra.mxu0 0.0
          %2349 = vmatprep.subr.mxu0 0.0
          %2350 = vmatpush1.msra.mxu0 0.0
          %2351 = vmatprep.subr.mxu0 0.0
          %2352 = vmatpush1.msra.mxu0 0.0
          %2353 = vmatprep.subr.mxu0 0.0
          %2354 = vmatpush1.msra.mxu0 0.0
          %2355 = vmatprep.subr.mxu0 0.0
          %2356 = vmatpush1.msra.mxu0 0.0
          %2357 = vmatprep.subr.mxu0 0.0
          %2358 = vmatpush1.msra.mxu0 0.0
          %2359 = vmatprep.subr.mxu0 0.0
          %2360 = vmatpush1.msra.mxu0 0.0
          %2361 = vmatprep.subr.mxu0 0.0
          %2362 = vmatpush1.msra.mxu0 0.0
          %2363 = vmatprep.subr.mxu0 0.0
          %2364 = vmatpush1.msra.mxu0 0.0
          %2365 = vmatprep.subr.mxu0 0.0
          %2366 = vmatpush1.msra.mxu0 0.0
          %2367 = vmatprep.subr.mxu0 0.0
          %2368 = vmatpush1.msra.mxu0 0.0
          %2369 = vmatprep.subr.mxu0 0.0
          %2370 = vmatpush1.msra.mxu0 0.0
          %2371 = vmatprep.subr.mxu0 0.0
          %2372 = vmatpush1.msra.mxu0 0.0
          %2373 = vmatprep.subr.mxu0 0.0
          %2374 = vmatpush1.msra.mxu0 0.0
          %2375 = vmatprep.mubr.f32.mxu0 0.0
          %2376 = vmatmul.mubr.f32.gmra.mrb[0].mxu0 %v2309
          %v2377 = vpop.f32.mrb[0].mxu0
          %v2378 = vadd.f32 %v2307, %v2377
          %v2379 = vpop.f32.mrb[0].mxu0
          %2380 = vdwg.mxu0
          %2381 = vst [vmem:[%s544] sm:$0x1] %v2378
        $region84: #{vit_forward.1} parent=75 // pred_fallthru
          _
        %s2382 = sand.u32 %s372, 1
        %s2383 = scalar_lea.sflag [#allocation4], %s2382
        %s2384 = sand.u32 %s372, 1
        %s2385 = scalar_lea.vmem [#allocation3], %s2384
        // Predicated region
        $region85: #{vit_forward.1} parent=75 // pred_check
          %p2386 = pneg %p382
        $region86: #{vit_forward.1} parent=75 // pred_check_branch
          %2388 = sbr.rel (%p2386) target = $region88
        $region87: #{vit_forward.1} parent=75 // pred_region
          %s2390 = ssub.s32 16, 16
          %2391 = vsyncadd %s2383, %s2390
          %s2392 = smul.addr %s32, 16
          %s2393 = scalar_lea.hbm %s14, %s2392
          %s2395 = sshll.u32 %s2385, 4
          %s2396 = int_to_ptr.vmem [resolvable:$true] %s2395
          %2398 = dma.vmem_to_hbm [thread:$0]  %s2396, 16, %s2393, %s2383
        $region88: #{vit_forward.1} parent=75 // pred_fallthru
          _
      $region76: #{vit_forward.1} parent=5 // pred_fallthru
        _
      %p2399 = scmp.le.s32.totalorder 2, %s23
      // Predicated region
      $region89: #{vit_forward.1} parent=5 // pred_check
        %p2400 = pneg %p2399
      $region90: #{vit_forward.1} parent=5 // pred_check_branch
        %2402 = sbr.rel (%p2400) target = $region92
      $region91: #{vit_forward.1} parent=5 // pred_region
        %s2403 = ssub.s32 %s23, 2
        // Predicated region
        $region93: #{vit_forward.1} parent=91 // pred_check
          %p2404 = pneg %p388
        $region94: #{vit_forward.1} parent=91 // pred_check_branch
          %2406 = sbr.rel (%p2404) target = $region96
        $region95: #{vit_forward.1} parent=91 // pred_region
          %s2407 = sand.u32 %s373, 1
          %s2408 = scalar_lea.sflag [#allocation4], %s2407
          %s2409 = sand.u32 %s373, 1
          %s2410 = scalar_lea.vmem [#allocation3], %s2409
          %2411 = dma.done %s2408, 16
        $region96: #{vit_forward.1} parent=91 // pred_fallthru
          _
      $region92: #{vit_forward.1} parent=5 // pred_fallthru
        _
    $region6: #{vit_forward.1} parent=1 // loop_footer
      %s27 = sadd.s32 1, %s23
    $region7: #{vit_forward.1} parent=1 // loop_footer_branch
      %22 = sbr.rel target = $region3
    $region8: #{vit_forward.1} parent=1 // loop_exit
      _
    %2412 = vsyncpa [#allocation4], 1
    %s2413 = scalar_lea.sflag [#allocation4], 1
    %2414 = vsyncpa %s2413, 1

</llo_original>
